<compile_context>
chip_gen: v6e
topology: v6e:2x2x1
jax: 0.10.0
libtpu: 0.0.40
codegen_flags: <defaults>
</compile_context>

<pallas_src>
import math

import jax
import jax.numpy as jnp
from jax import lax
from jax.experimental import pallas as pl
from jax.experimental.pallas import tpu as pltpu

_LN_EPS = 1e-5  # PyTorch nn.LayerNorm default

_vmem_limit_cache = None


def _vmem_limit_bytes():
    """3/4 of physical VMEM (v5e/v6e: 128 MiB, v7x: 64 MiB), with a safe fallback."""
    global _vmem_limit_cache
    if _vmem_limit_cache is None:
        try:
            cap = pltpu.get_tpu_info().vmem_capacity_bytes
            _vmem_limit_cache = int(cap * 3 // 4)
        except Exception:  # pragma: no cover - conservative fallback
            _vmem_limit_cache = 48 * 1024 * 1024
    return _vmem_limit_cache


def _seq_tile(n, dtype, max_tile=512):
    """Sequence tile: full seq if small, else a divisor that respects the
    packed sublane tile (8 for f32, 16 for bf16, 32 for int8/fp8)."""
    pack = {4: 8, 2: 16, 1: 32}.get(jnp.dtype(dtype).itemsize, 8)
    if n <= max_tile:
        return n
    for t in (512, 256, 128, 64, 32, 16):
        if t >= pack and n % t == 0:
            return t
    return n


# ---------------------------------------------------------------------------
# Kernel 1: fused  QKV projection + MHA + out-projection + residual + LayerNorm1
#   grid = (batch, head);  head axis is a reduction (out-proj accumulation).
# ---------------------------------------------------------------------------
def _make_attn_ln1_kernel(has_pos, scale):
    def kernel(*refs):
        if has_pos:
            (src_ref, pos_ref, wq_ref, bq_ref, wk_ref, bk_ref, wv_ref, bv_ref,
             wo_ref, bo_ref, g_ref, beta_ref, o_ref, acc_ref) = refs
        else:
            (src_ref, wq_ref, bq_ref, wk_ref, bk_ref, wv_ref, bv_ref,
             wo_ref, bo_ref, g_ref, beta_ref, o_ref, acc_ref) = refs

        head = pl.program_id(1)

        @pl.when(head == 0)
        def _init():
            acc_ref[...] = jnp.zeros_like(acc_ref)

        src = src_ref[0]                                     # [n, C], native dtype
        qk_in = (src + pos_ref[0]) if has_pos else src

        # Per-head projections: operands stay in their native dtype (single MXU
        # pass for bf16); accumulation is f32 via preferred_element_type.
        q = jnp.dot(qk_in, wq_ref[0], preferred_element_type=jnp.float32) \
            + bq_ref[0].astype(jnp.float32)                  # [n, hd] f32
        k = jnp.dot(qk_in, wk_ref[0], preferred_element_type=jnp.float32) \
            + bk_ref[0].astype(jnp.float32)                  # [n, hd] f32
        v = jnp.dot(src, wv_ref[0], preferred_element_type=jnp.float32) \
            + bv_ref[0].astype(jnp.float32)                  # [n, hd] f32

        # Scores + softmax in f32 (q @ k^T without an explicit transpose).
        s = lax.dot_general(q, k, (((1,), (1,)), ((), ())),
                            preferred_element_type=jnp.float32) * scale   # [n, n]
        m = jnp.max(s, axis=-1, keepdims=True)
        p = jnp.exp(s - m)
        l = jnp.sum(p, axis=-1, keepdims=True)               # [n, 1]

        pv = jnp.dot(p, v, preferred_element_type=jnp.float32)            # [n, hd]
        # Fold 1/l into the PV output: EUP reciprocal + one Newton refinement
        # on the [n,1] column (instead of a VALU divide over the [n,n] matrix).
        inv_l = pl.reciprocal(l, approx=True)
        inv_l = inv_l * (2.0 - l * inv_l)
        attn_h = pv * inv_l                                  # [n, hd]

        # This head's slice of the output projection, accumulated over heads.
        acc_ref[...] += jnp.dot(attn_h.astype(wo_ref.dtype), wo_ref[0],
                                preferred_element_type=jnp.float32)        # [n, C]

        @pl.when(head == pl.num_programs(1) - 1)
        def _finalize():
            out = acc_ref[...] + bo_ref[...].astype(jnp.float32)
            r = src.astype(jnp.float32) + out                # residual add
            mu = jnp.mean(r, axis=-1, keepdims=True)
            var = jnp.mean(jnp.square(r - mu), axis=-1, keepdims=True)
            norm = (r - mu) * lax.rsqrt(var + _LN_EPS)
            o_ref[0] = (norm * g_ref[...].astype(jnp.float32)
                        + beta_ref[...].astype(jnp.float32)).astype(o_ref.dtype)

    return kernel


def pallas_attn_ln1(src, pos, params):
    bs, n, C = src.shape
    nh = params["num_heads"]
    hd = C // nh
    scale = 1.0 / math.sqrt(hd)

    # Head-major weight/bias layouts (one-time XLA layout plumbing) so each
    # grid step receives its head's slice directly from BlockSpec — no
    # in-kernel non-128-aligned lane slicing, no concatenates.
    def cols_by_head(w):          # [C, C] -> [nh, C, hd]
        return w.reshape(C, nh, hd).transpose(1, 0, 2)

    def bias_by_head(b):          # [C]    -> [nh, 1, hd]
        return b.reshape(nh, 1, hd)

    wq = cols_by_head(params["w_q"]); bq = bias_by_head(params["b_q"])
    wk = cols_by_head(params["w_k"]); bk = bias_by_head(params["b_k"])
    wv = cols_by_head(params["w_v"]); bv = bias_by_head(params["b_v"])
    wo = params["w_o"].reshape(nh, hd, C)                    # rows grouped by head
    bo = params["b_o"].reshape(1, C)
    gamma = params["ln1_g"].reshape(1, C)
    beta = params["ln1_b"].reshape(1, C)

    has_pos = pos is not None

    seq_spec = pl.BlockSpec((1, n, C), lambda b, h: (b, 0, 0))
    head_w_spec = pl.BlockSpec((1, C, hd), lambda b, h: (h, 0, 0))
    head_b_spec = pl.BlockSpec((1, 1, hd), lambda b, h: (h, 0, 0))
    wo_spec = pl.BlockSpec((1, hd, C), lambda b, h: (h, 0, 0))
    row_spec = pl.BlockSpec((1, C), lambda b, h: (0, 0))

    in_specs = [seq_spec]
    args = [src]
    if has_pos:
        in_specs.append(seq_spec)
        args.append(pos)
    in_specs += [head_w_spec, head_b_spec,       # Wq, bq
                 head_w_spec, head_b_spec,       # Wk, bk
                 head_w_spec, head_b_spec,       # Wv, bv
                 wo_spec, row_spec,              # Wo, bo
                 row_spec, row_spec]             # gamma, beta
    args += [wq, bq, wk, bk, wv, bv, wo, bo, gamma, beta]

    return pl.pallas_call(
        _make_attn_ln1_kernel(has_pos, scale),
        out_shape=jax.ShapeDtypeStruct((bs, n, C), src.dtype),
        grid=(bs, nh),
        in_specs=in_specs,
        out_specs=seq_spec,
        scratch_shapes=[pltpu.VMEM((n, C), jnp.float32)],    # out-proj accumulator
        compiler_params=pltpu.CompilerParams(
            dimension_semantics=("parallel", "arbitrary"),
            vmem_limit_bytes=_vmem_limit_bytes()),
    )(*args)


# ---------------------------------------------------------------------------
# Kernel 2: FFN (linear1 + ReLU + linear2) + residual add + LayerNorm2
# ---------------------------------------------------------------------------
def _ffn_ln2_kernel(h_ref, w1_ref, b1_ref, w2_ref, b2_ref, g_ref, beta_ref, o_ref):
    h_in = h_ref[0]                                          # [tn, C], native dtype
    t = jnp.dot(h_in, w1_ref[...], preferred_element_type=jnp.float32) \
        + b1_ref[...].astype(jnp.float32)                    # [tn, dff] f32
    t = jnp.maximum(t, 0.0)                                  # ReLU
    y = jnp.dot(t.astype(w2_ref.dtype), w2_ref[...],
                preferred_element_type=jnp.float32) + b2_ref[...].astype(jnp.float32)
    r = h_in.astype(jnp.float32) + y                         # residual add
    mu = jnp.mean(r, axis=-1, keepdims=True)
    var = jnp.mean(jnp.square(r - mu), axis=-1, keepdims=True)
    norm = (r - mu) * lax.rsqrt(var + _LN_EPS)
    o_ref[0] = (norm * g_ref[...].astype(jnp.float32)
                + beta_ref[...].astype(jnp.float32)).astype(o_ref.dtype)


def pallas_ffn_ln2(h, w1, b1, w2, b2, gamma, beta):
    bs, n, C = h.shape
    dff = w1.shape[1]
    tn = _seq_tile(n, h.dtype)
    # Weights are grid-invariant blocks (index map constant) and therefore stay
    # VMEM-resident across the seq-tile axis.
    return pl.pallas_call(
        _ffn_ln2_kernel,
        out_shape=jax.ShapeDtypeStruct((bs, n, C), h.dtype),
        grid=(bs, pl.cdiv(n, tn)),
        in_specs=[
            pl.BlockSpec((1, tn, C), lambda b, i: (b, i, 0)),
            pl.BlockSpec((C, dff), lambda b, i: (0, 0)),
            pl.BlockSpec((1, dff), lambda b, i: (0, 0)),
            pl.BlockSpec((dff, C), lambda b, i: (0, 0)),
            pl.BlockSpec((1, C), lambda b, i: (0, 0)),
            pl.BlockSpec((1, C), lambda b, i: (0, 0)),
            pl.BlockSpec((1, C), lambda b, i: (0, 0)),
        ],
        out_specs=pl.BlockSpec((1, tn, C), lambda b, i: (b, i, 0)),
        compiler_params=pltpu.CompilerParams(
            dimension_semantics=("parallel", "parallel"),
            vmem_limit_bytes=_vmem_limit_bytes()),
    )(h, w1, b1.reshape(1, dff), w2, b2.reshape(1, C),
      gamma.reshape(1, C), beta.reshape(1, C))


# ---------------------------------------------------------------------------
# Pure-JAX reference (same math, no Pallas) for correctness checking
# ---------------------------------------------------------------------------
def _ref_forward(params, src, pos):
    bs, n, C = src.shape
    nh = params["num_heads"]
    hd = C // nh
    hp = lax.Precision.HIGHEST

    qk_in = src if pos is None else src + pos
    q = jnp.dot(qk_in, params["w_q"], precision=hp) + params["b_q"]
    k = jnp.dot(qk_in, params["w_k"], precision=hp) + params["b_k"]
    v = jnp.dot(src, params["w_v"], precision=hp) + params["b_v"]

    def split(t):
        return t.reshape(bs, n, nh, hd).transpose(0, 2, 1, 3)

    qh, kh, vh = split(q), split(k), split(v)
    s = jnp.einsum("bhqd,bhkd->bhqk", qh, kh, precision=hp) / math.sqrt(hd)
    p = jax.nn.softmax(s, axis=-1)
    oh = jnp.einsum("bhqk,bhkd->bhqd", p, vh, precision=hp)
    attn = oh.transpose(0, 2, 1, 3).reshape(bs, n, C)
    attn = jnp.dot(attn, params["w_o"], precision=hp) + params["b_o"]

    def layer_norm(x, g, b):
        mu = jnp.mean(x, axis=-1, keepdims=True)
        var = jnp.mean(jnp.square(x - mu), axis=-1, keepdims=True)
        return (x - mu) * lax.rsqrt(var + _LN_EPS) * g + b

    h = layer_norm(src + attn, params["ln1_g"], params["ln1_b"])
    t = jnp.maximum(jnp.dot(h, params["w1"], precision=hp) + params["b1"], 0.0)
    y = jnp.dot(t, params["w2"], precision=hp) + params["b2"]
    return layer_norm(h + y, params["ln2_g"], params["ln2_b"])


# ---------------------------------------------------------------------------
# Full forward (post-norm path, eval mode)
# ---------------------------------------------------------------------------
def encoder_layer_forward(params, src, pos_embed=None, use_pallas=True):
    # TODO(synk): src_mask / src_key_padding_mask (reference defaults: None),
    # dropout (identity in eval mode) and the normalize_before=True pre-norm
    # path are not implemented.
    if not use_pallas:
        return _ref_forward(params, src, pos_embed)
    h = pallas_attn_ln1(src, pos_embed, params)
    return pallas_ffn_ln2(h, params["w1"], params["b1"], params["w2"],
                          params["b2"], params["ln2_g"], params["ln2_b"])


# ---------------------------------------------------------------------------
# Deterministic parameter construction (same shapes as the PyTorch module)
# ---------------------------------------------------------------------------
def init_params(key, d_model, num_heads, dim_feedforward):
    ks = jax.random.split(key, 12)

    def xavier(k, fan_in, fan_out):
        limit = math.sqrt(6.0 / (fan_in + fan_out))
        return jax.random.uniform(k, (fan_in, fan_out), jnp.float32, -limit, limit)

    def small(k, shape):
        return 0.02 * jax.random.normal(k, shape, jnp.float32)

    return dict(
        num_heads=num_heads,
        w_q=xavier(ks[0], d_model, d_model), b_q=small(ks[1], (d_model,)),
        w_k=xavier(ks[2], d_model, d_model), b_k=small(ks[3], (d_model,)),
        w_v=xavier(ks[4], d_model, d_model), b_v=small(ks[5], (d_model,)),
        w_o=xavier(ks[6], d_model, d_model), b_o=small(ks[7], (d_model,)),
        w1=xavier(ks[8], d_model, dim_feedforward), b1=small(ks[9], (dim_feedforward,)),
        w2=xavier(ks[10], dim_feedforward, d_model), b2=small(ks[11], (d_model,)),
        ln1_g=jnp.ones((d_model,), jnp.float32), ln1_b=jnp.zeros((d_model,), jnp.float32),
        ln2_g=jnp.ones((d_model,), jnp.float32), ln2_b=jnp.zeros((d_model,), jnp.float32),
    )


if __name__ == "__main__":
    d_model, nhead, dim_feedforward = 32, 4, 64
    bs, seq = 2, 16

    key = jax.random.PRNGKey(0)
    k_src, k_pos, k_par = jax.random.split(key, 3)
    src = jax.random.normal(k_src, (bs, seq, d_model), jnp.float32)
    pos_embed = 0.1 * jax.random.normal(k_pos, (bs, seq, d_model), jnp.float32)
    params = init_params(k_par, d_model, nhead, dim_feedforward)

    # With positional embedding.
    out = encoder_layer_forward(params, src, pos_embed, use_pallas=True)
    out = jax.block_until_ready(out)
    ref = encoder_layer_forward(params, src, pos_embed, use_pallas=False)
    assert out.shape == (bs, seq, d_model)
    max_err = float(jnp.max(jnp.abs(out - ref)))
    assert jnp.allclose(out, ref, atol=3e-3, rtol=3e-3), max_err

    # Without positional embedding (exercises the no-pos kernel variant,
    # which avoids DMAing a zero tensor).
    out_np = encoder_layer_forward(params, src, None, use_pallas=True)
    out_np = jax.block_until_ready(out_np)
    ref_np = encoder_layer_forward(params, src, None, use_pallas=False)
    max_err_np = float(jnp.max(jnp.abs(out_np - ref_np)))
    assert jnp.allclose(out_np, ref_np, atol=3e-3, rtol=3e-3), max_err_np

    print("KERNEL_OK")
</pallas_src>

<mosaic_0001>
module attributes {stable_mosaic.version = 11 : i64} {
  func.func @kernel(%arg0: i32, %arg1: i32, %arg2: memref<1x16x32xf32, #tpu.memory_space<vmem>>, %arg3: memref<1x16x32xf32, #tpu.memory_space<vmem>>, %arg4: memref<1x32x8xf32, #tpu.memory_space<vmem>>, %arg5: memref<1x1x8xf32, #tpu.memory_space<vmem>>, %arg6: memref<1x32x8xf32, #tpu.memory_space<vmem>>, %arg7: memref<1x1x8xf32, #tpu.memory_space<vmem>>, %arg8: memref<1x32x8xf32, #tpu.memory_space<vmem>>, %arg9: memref<1x1x8xf32, #tpu.memory_space<vmem>>, %arg10: memref<1x8x32xf32, #tpu.memory_space<vmem>>, %arg11: memref<1x32xf32, #tpu.memory_space<vmem>>, %arg12: memref<1x32xf32, #tpu.memory_space<vmem>>, %arg13: memref<1x32xf32, #tpu.memory_space<vmem>>, %arg14: memref<1x16x32xf32, #tpu.memory_space<vmem>>, %arg15: memref<16x32xf32, #tpu.memory_space<vmem>>) attributes {dimension_semantics = [#tpu.dimension_semantics<parallel>, #tpu.dimension_semantics<arbitrary>], iteration_bounds = array<i64: 2, 4>, scalar_prefetch = 0 : i64, scratch_operands = 1 : i64, tpu.core_type = #tpu.core_type<tc>, window_params = [{transform_indices = @transform_0, window_bounds = array<i64: 1, 16, 32>}, {transform_indices = @transform_1, window_bounds = array<i64: 1, 16, 32>}, {transform_indices = @transform_2, window_bounds = array<i64: 1, 32, 8>}, {transform_indices = @transform_3, window_bounds = array<i64: 1, 1, 8>}, {transform_indices = @transform_4, window_bounds = array<i64: 1, 32, 8>}, {transform_indices = @transform_5, window_bounds = array<i64: 1, 1, 8>}, {transform_indices = @transform_6, window_bounds = array<i64: 1, 32, 8>}, {transform_indices = @transform_7, window_bounds = array<i64: 1, 1, 8>}, {transform_indices = @transform_8, window_bounds = array<i64: 1, 8, 32>}, {pipeline_mode = #tpu.pipeline_mode<synchronous>, transform_indices = @transform_9, window_bounds = array<i64: 1, 32>}, {pipeline_mode = #tpu.pipeline_mode<synchronous>, transform_indices = @transform_10, window_bounds = array<i64: 1, 32>}, {pipeline_mode = #tpu.pipeline_mode<synchronous>, transform_indices = @transform_11, window_bounds = array<i64: 1, 32>}, {transform_indices = @transform_12, window_bounds = array<i64: 1, 16, 32>}]} {
    %c0_i32 = arith.constant 0 : i32
    %0 = arith.cmpi eq, %arg1, %c0_i32 : i32
    %1 = arith.extui %0 : i1 to i32
    %c0_i32_0 = arith.constant 0 : i32
    %2 = arith.cmpi ne, %1, %c0_i32_0 : i32
    scf.if %2 {
      %cst_41 = arith.constant 0.000000e+00 : f32
      %56 = vector.broadcast %cst_41 : f32 to vector<16x32xf32>
      %c0_42 = arith.constant 0 : index
      %c0_43 = arith.constant 0 : index
      %57 = vector.load %arg15[%c0_42, %c0_43] : memref<16x32xf32, #tpu.memory_space<vmem>>, vector<16x32xf32>
      tpu.vector_store %arg15[%c0_42, %c0_43], %56 {strides = array<i32>} : memref<16x32xf32, #tpu.memory_space<vmem>>, vector<16x32xf32>,
    } else {
    }
    %c0 = arith.constant 0 : index
    %c0_1 = arith.constant 0 : index
    %c0_2 = arith.constant 0 : index
    %3 = vector.load %arg2[%c0, %c0_1, %c0_2] : memref<1x16x32xf32, #tpu.memory_space<vmem>>, vector<1x16x32xf32>
    %4 = vector.shape_cast %3 : vector<1x16x32xf32> to vector<16x32xf32>
    %c0_3 = arith.constant 0 : index
    %c0_4 = arith.constant 0 : index
    %c0_5 = arith.constant 0 : index
    %5 = vector.load %arg3[%c0_3, %c0_4, %c0_5] : memref<1x16x32xf32, #tpu.memory_space<vmem>>, vector<1x16x32xf32>
    %6 = vector.shape_cast %5 : vector<1x16x32xf32> to vector<16x32xf32>
    %7 = arith.addf %4, %6 : vector<16x32xf32>
    %c0_6 = arith.constant 0 : index
    %c0_7 = arith.constant 0 : index
    %c0_8 = arith.constant 0 : index
    %8 = vector.load %arg4[%c0_6, %c0_7, %c0_8] : memref<1x32x8xf32, #tpu.memory_space<vmem>>, vector<1x32x8xf32>
    %9 = vector.shape_cast %8 : vector<1x32x8xf32> to vector<32x8xf32>
    %cst = arith.constant dense<0.000000e+00> : vector<16x8xf32>
    %10 = tpu.matmul %7, %9, %cst {dimension_numbers = #tpu.dot_dimension_numbers<[1], [0], [0], [1], [0, 0, 1, 1], [], []>} : vector<16x32xf32>, vector<32x8xf32>, vector<16x8xf32> -> vector<16x8xf32>
    %c0_9 = arith.constant 0 : index
    %c0_10 = arith.constant 0 : index
    %c0_11 = arith.constant 0 : index
    %11 = vector.load %arg5[%c0_9, %c0_10, %c0_11] : memref<1x1x8xf32, #tpu.memory_space<vmem>>, vector<1x1x8xf32>
    %12 = vector.shape_cast %11 : vector<1x1x8xf32> to vector<1x8xf32>
    %13 = vector.broadcast %12 : vector<1x8xf32> to vector<16x8xf32>
    %14 = arith.addf %10, %13 : vector<16x8xf32>
    %c0_12 = arith.constant 0 : index
    %c0_13 = arith.constant 0 : index
    %c0_14 = arith.constant 0 : index
    %15 = vector.load %arg6[%c0_12, %c0_13, %c0_14] : memref<1x32x8xf32, #tpu.memory_space<vmem>>, vector<1x32x8xf32>
    %16 = vector.shape_cast %15 : vector<1x32x8xf32> to vector<32x8xf32>
    %cst_15 = arith.constant dense<0.000000e+00> : vector<16x8xf32>
    %17 = tpu.matmul %7, %16, %cst_15 {dimension_numbers = #tpu.dot_dimension_numbers<[1], [0], [0], [1], [0, 0, 1, 1], [], []>} : vector<16x32xf32>, vector<32x8xf32>, vector<16x8xf32> -> vector<16x8xf32>
    %c0_16 = arith.constant 0 : index
    %c0_17 = arith.constant 0 : index
    %c0_18 = arith.constant 0 : index
    %18 = vector.load %arg7[%c0_16, %c0_17, %c0_18] : memref<1x1x8xf32, #tpu.memory_space<vmem>>, vector<1x1x8xf32>
    %19 = vector.shape_cast %18 : vector<1x1x8xf32> to vector<1x8xf32>
    %20 = vector.broadcast %19 : vector<1x8xf32> to vector<16x8xf32>
    %21 = arith.addf %17, %20 : vector<16x8xf32>
    %c0_19 = arith.constant 0 : index
    %c0_20 = arith.constant 0 : index
    %c0_21 = arith.constant 0 : index
    %22 = vector.load %arg8[%c0_19, %c0_20, %c0_21] : memref<1x32x8xf32, #tpu.memory_space<vmem>>, vector<1x32x8xf32>
    %23 = vector.shape_cast %22 : vector<1x32x8xf32> to vector<32x8xf32>
    %cst_22 = arith.constant dense<0.000000e+00> : vector<16x8xf32>
    %24 = tpu.matmul %4, %23, %cst_22 {dimension_numbers = #tpu.dot_dimension_numbers<[1], [0], [0], [1], [0, 0, 1, 1], [], []>} : vector<16x32xf32>, vector<32x8xf32>, vector<16x8xf32> -> vector<16x8xf32>
    %c0_23 = arith.constant 0 : index
    %c0_24 = arith.constant 0 : index
    %c0_25 = arith.constant 0 : index
    %25 = vector.load %arg9[%c0_23, %c0_24, %c0_25] : memref<1x1x8xf32, #tpu.memory_space<vmem>>, vector<1x1x8xf32>
    %26 = vector.shape_cast %25 : vector<1x1x8xf32> to vector<1x8xf32>
    %27 = vector.broadcast %26 : vector<1x8xf32> to vector<16x8xf32>
    %28 = arith.addf %24, %27 : vector<16x8xf32>
    %cst_26 = arith.constant dense<0.000000e+00> : vector<16x16xf32>
    %29 = tpu.matmul %14, %21, %cst_26 {dimension_numbers = #tpu.dot_dimension_numbers<[1], [1], [0], [0], [0, 0, 1, 0], [], []>} : vector<16x8xf32>, vector<16x8xf32>, vector<16x16xf32> -> vector<16x16xf32>
    %cst_27 = arith.constant 0.353553385 : f32
    %30 = vector.broadcast %cst_27 : f32 to vector<16x16xf32>
    %31 = arith.mulf %29, %30 : vector<16x16xf32>
    %cst_28 = arith.constant dense<0xFF800000> : vector<16xf32>
    %32 = vector.multi_reduction <maximumf>, %31, %cst_28 [1] : vector<16x16xf32> to vector<16xf32>
    %33 = vector.shape_cast %32 : vector<16xf32> to vector<16x1xf32>
    %34 = vector.broadcast %33 : vector<16x1xf32> to vector<16x16xf32>
    %35 = arith.subf %31, %34 : vector<16x16xf32>
    %36 = math.exp %35 : vector<16x16xf32>
    %cst_29 = arith.constant dense<0.000000e+00> : vector<16xf32>
    %37 = vector.multi_reduction <add>, %36, %cst_29 [1] : vector<16x16xf32> to vector<16xf32>
    %38 = vector.shape_cast %37 : vector<16xf32> to vector<16x1xf32>
    %cst_30 = arith.constant dense<0.000000e+00> : vector<16x8xf32>
    %39 = tpu.matmul %36, %28, %cst_30 {dimension_numbers = #tpu.dot_dimension_numbers<[1], [0], [0], [1], [0, 0, 1, 1], [], []>} : vector<16x16xf32>, vector<16x8xf32>, vector<16x8xf32> -> vector<16x8xf32>
    %40 = tpu.reciprocal %38 {approx = true} : vector<16x1xf32> -> vector<16x1xf32>
    %41 = arith.mulf %38, %40 : vector<16x1xf32>
    %cst_31 = arith.constant 2.000000e+00 : f32
    %42 = vector.broadcast %cst_31 : f32 to vector<16x1xf32>
    %43 = arith.subf %42, %41 : vector<16x1xf32>
    %44 = arith.mulf %40, %43 : vector<16x1xf32>
    %45 = vector.broadcast %44 : vector<16x1xf32> to vector<16x8xf32>
    %46 = arith.mulf %39, %45 : vector<16x8xf32>
    %c0_32 = arith.constant 0 : index
    %c0_33 = arith.constant 0 : index
    %47 = vector.load %arg15[%c0_32, %c0_33] : memref<16x32xf32, #tpu.memory_space<vmem>>, vector<16x32xf32>
    %c0_34 = arith.constant 0 : index
    %c0_35 = arith.constant 0 : index
    %c0_36 = arith.constant 0 : index
    %48 = vector.load %arg10[%c0_34, %c0_35, %c0_36] : memref<1x8x32xf32, #tpu.memory_space<vmem>>, vector<1x8x32xf32>
    %49 = vector.shape_cast %48 : vector<1x8x32xf32> to vector<8x32xf32>
    %cst_37 = arith.constant dense<0.000000e+00> : vector<16x32xf32>
    %50 = tpu.matmul %46, %49, %cst_37 {dimension_numbers = #tpu.dot_dimension_numbers<[1], [0], [0], [1], [0, 0, 1, 1], [], []>} : vector<16x8xf32>, vector<8x32xf32>, vector<16x32xf32> -> vector<16x32xf32>
    %51 = arith.addf %47, %50 : vector<16x32xf32>
    %c0_38 = arith.constant 0 : index
    %c0_39 = arith.constant 0 : index
    %52 = vector.load %arg15[%c0_38, %c0_39] : memref<16x32xf32, #tpu.memory_space<vmem>>, vector<16x32xf32>
    tpu.vector_store %arg15[%c0_38, %c0_39], %51 {strides = array<i32>} : memref<16x32xf32, #tpu.memory_space<vmem>>, vector<16x32xf32>,
    %c3_i32 = arith.constant 3 : i32
    %53 = arith.cmpi eq, %arg1, %c3_i32 : i32
    %54 = arith.extui %53 : i1 to i32
    %c0_i32_40 = arith.constant 0 : i32
    %55 = arith.cmpi ne, %54, %c0_i32_40 : i32
    scf.if %55 {
      %c0_41 = arith.constant 0 : index
      %c0_42 = arith.constant 0 : index
      %56 = vector.load %arg15[%c0_41, %c0_42] : memref<16x32xf32, #tpu.memory_space<vmem>>, vector<16x32xf32>
      %c0_43 = arith.constant 0 : index
      %c0_44 = arith.constant 0 : index
      %57 = vector.load %arg11[%c0_43, %c0_44] : memref<1x32xf32, #tpu.memory_space<vmem>>, vector<1x32xf32>
      %58 = vector.broadcast %57 : vector<1x32xf32> to vector<16x32xf32>
      %59 = arith.addf %56, %58 : vector<16x32xf32>
      %60 = arith.addf %4, %59 : vector<16x32xf32>
      %cst_45 = arith.constant dense<0.000000e+00> : vector<16xf32>
      %61 = vector.multi_reduction <add>, %60, %cst_45 [1] : vector<16x32xf32> to vector<16xf32>
      %62 = vector.shape_cast %61 : vector<16xf32> to vector<16x1xf32>
      %cst_46 = arith.constant 3.200000e+01 : f32
      %63 = vector.broadcast %cst_46 : f32 to vector<16x1xf32>
      %64 = arith.divf %62, %63 : vector<16x1xf32>
      %65 = vector.broadcast %64 : vector<16x1xf32> to vector<16x32xf32>
      %66 = arith.subf %60, %65 : vector<16x32xf32>
      %67 = arith.mulf %66, %66 : vector<16x32xf32>
      %cst_47 = arith.constant dense<0.000000e+00> : vector<16xf32>
      %68 = vector.multi_reduction <add>, %67, %cst_47 [1] : vector<16x32xf32> to vector<16xf32>
      %69 = vector.shape_cast %68 : vector<16xf32> to vector<16x1xf32>
      %cst_48 = arith.constant 3.200000e+01 : f32
      %70 = vector.broadcast %cst_48 : f32 to vector<16x1xf32>
      %71 = arith.divf %69, %70 : vector<16x1xf32>
      %72 = vector.broadcast %64 : vector<16x1xf32> to vector<16x32xf32>
      %73 = arith.subf %60, %72 : vector<16x32xf32>
      %cst_49 = arith.constant 9.99999974E-6 : f32
      %74 = vector.broadcast %cst_49 : f32 to vector<16x1xf32>
      %75 = arith.addf %71, %74 : vector<16x1xf32>
      %76 = math.rsqrt %75 : vector<16x1xf32>
      %77 = vector.broadcast %76 : vector<16x1xf32> to vector<16x32xf32>
      %78 = arith.mulf %73, %77 : vector<16x32xf32>
      %c0_50 = arith.constant 0 : index
      %c0_51 = arith.constant 0 : index
      %79 = vector.load %arg12[%c0_50, %c0_51] : memref<1x32xf32, #tpu.memory_space<vmem>>, vector<1x32xf32>
      %80 = vector.broadcast %79 : vector<1x32xf32> to vector<16x32xf32>
      %81 = arith.mulf %78, %80 : vector<16x32xf32>
      %c0_52 = arith.constant 0 : index
      %c0_53 = arith.constant 0 : index
      %82 = vector.load %arg13[%c0_52, %c0_53] : memref<1x32xf32, #tpu.memory_space<vmem>>, vector<1x32xf32>
      %83 = vector.broadcast %82 : vector<1x32xf32> to vector<16x32xf32>
      %84 = arith.addf %81, %83 : vector<16x32xf32>
      %c0_54 = arith.constant 0 : index
      %c0_55 = arith.constant 0 : index
      %c0_56 = arith.constant 0 : index
      %85 = vector.load %arg14[%c0_54, %c0_55, %c0_56] : memref<1x16x32xf32, #tpu.memory_space<vmem>>, vector<1x16x32xf32>
      %86 = vector.shape_cast %85 : vector<1x16x32xf32> to vector<16x32xf32>
      %87 = vector.shape_cast %84 : vector<16x32xf32> to vector<1x16x32xf32>
      tpu.vector_store %arg14[%c0_54, %c0_55, %c0_56], %87 {strides = array<i32>} : memref<1x16x32xf32, #tpu.memory_space<vmem>>, vector<1x16x32xf32>,
    } else {
    }
    return
  }
  func.func @transform_0(%arg0: i32, %arg1: i32) -> (i32, i32, i32) {
    %c0_i32 = arith.constant 0 : i32
    %c0_i32_0 = arith.constant 0 : i32
    %c0_i32_1 = arith.constant 0 : i32
    return %arg0, %c0_i32, %c0_i32_0 : i32, i32, i32
  }
  func.func @transform_1(%arg0: i32, %arg1: i32) -> (i32, i32, i32) {
    %c0_i32 = arith.constant 0 : i32
    %c0_i32_0 = arith.constant 0 : i32
    %c0_i32_1 = arith.constant 0 : i32
    return %arg0, %c0_i32, %c0_i32_0 : i32, i32, i32
  }
  func.func @transform_2(%arg0: i32, %arg1: i32) -> (i32, i32, i32) {
    %c0_i32 = arith.constant 0 : i32
    %c0_i32_0 = arith.constant 0 : i32
    %c0_i32_1 = arith.constant 0 : i32
    return %arg1, %c0_i32, %c0_i32_0 : i32, i32, i32
  }
  func.func @transform_3(%arg0: i32, %arg1: i32) -> (i32, i32, i32) {
    %c0_i32 = arith.constant 0 : i32
    %c0_i32_0 = arith.constant 0 : i32
    %c0_i32_1 = arith.constant 0 : i32
    return %arg1, %c0_i32, %c0_i32_0 : i32, i32, i32
  }
  func.func @transform_4(%arg0: i32, %arg1: i32) -> (i32, i32, i32) {
    %c0_i32 = arith.constant 0 : i32
    %c0_i32_0 = arith.constant 0 : i32
    %c0_i32_1 = arith.constant 0 : i32
    return %arg1, %c0_i32, %c0_i32_0 : i32, i32, i32
  }
  func.func @transform_5(%arg0: i32, %arg1: i32) -> (i32, i32, i32) {
    %c0_i32 = arith.constant 0 : i32
    %c0_i32_0 = arith.constant 0 : i32
    %c0_i32_1 = arith.constant 0 : i32
    return %arg1, %c0_i32, %c0_i32_0 : i32, i32, i32
  }
  func.func @transform_6(%arg0: i32, %arg1: i32) -> (i32, i32, i32) {
    %c0_i32 = arith.constant 0 : i32
    %c0_i32_0 = arith.constant 0 : i32
    %c0_i32_1 = arith.constant 0 : i32
    return %arg1, %c0_i32, %c0_i32_0 : i32, i32, i32
  }
  func.func @transform_7(%arg0: i32, %arg1: i32) -> (i32, i32, i32) {
    %c0_i32 = arith.constant 0 : i32
    %c0_i32_0 = arith.constant 0 : i32
    %c0_i32_1 = arith.constant 0 : i32
    return %arg1, %c0_i32, %c0_i32_0 : i32, i32, i32
  }
  func.func @transform_8(%arg0: i32, %arg1: i32) -> (i32, i32, i32) {
    %c0_i32 = arith.constant 0 : i32
    %c0_i32_0 = arith.constant 0 : i32
    %c0_i32_1 = arith.constant 0 : i32
    return %arg1, %c0_i32, %c0_i32_0 : i32, i32, i32
  }
  func.func @transform_9(%arg0: i32, %arg1: i32) -> (i32, i32) {
    %c0_i32 = arith.constant 0 : i32
    %c0_i32_0 = arith.constant 0 : i32
    %c0_i32_1 = arith.constant 0 : i32
    return %c0_i32, %c0_i32_0 : i32, i32
  }
  func.func @transform_10(%arg0: i32, %arg1: i32) -> (i32, i32) {
    %c0_i32 = arith.constant 0 : i32
    %c0_i32_0 = arith.constant 0 : i32
    %c0_i32_1 = arith.constant 0 : i32
    return %c0_i32, %c0_i32_0 : i32, i32
  }
  func.func @transform_11(%arg0: i32, %arg1: i32) -> (i32, i32) {
    %c0_i32 = arith.constant 0 : i32
    %c0_i32_0 = arith.constant 0 : i32
    %c0_i32_1 = arith.constant 0 : i32
    return %c0_i32, %c0_i32_0 : i32, i32
  }
  func.func @transform_12(%arg0: i32, %arg1: i32) -> (i32, i32, i32) {
    %c0_i32 = arith.constant 0 : i32
    %c0_i32_0 = arith.constant 0 : i32
    %c0_i32_1 = arith.constant 0 : i32
    return %arg0, %c0_i32, %c0_i32_0 : i32, i32, i32
  }
}

</mosaic_0001>

<llo_original>
// kernel: tpu_custom_call.1
$region0: #{tpu_custom_call.1}
  #allocation0 [shape = 'u32[]', space=smem, size = 0x4, offset = 0x4, fixed_abs, tag = 'smem constant byte address 0x4 - core index']
  #allocation1 [shape = 'u32[144,128]{1,0:T(1,128)}', space=vmem, size = 0x12000, scoped, tag = 'internal scratch']
  #allocation2 [shape = 'f32[16,32]{1,0:T(8,128)}', space=vmem, size = 0x2000, scoped, tag = 'scratch operand']
  %s0 = inlined_call_operand.vmem [shape: f32[2,16,32], index: 0, kind: input, shape index: {}]
  %s1 = inlined_call_operand.vmem [shape: f32[2,16,32], index: 1, kind: input, shape index: {}]
  %s2 = inlined_call_operand.vmem [shape: f32[4,32,8], index: 2, kind: input, shape index: {}]
  %s3 = inlined_call_operand.vmem [shape: f32[4,1,8], index: 3, kind: input, shape index: {}]
  %s4 = inlined_call_operand.vmem [shape: f32[4,32,8], index: 4, kind: input, shape index: {}]
  %s5 = inlined_call_operand.vmem [shape: f32[4,1,8], index: 5, kind: input, shape index: {}]
  %s6 = inlined_call_operand.vmem [shape: f32[4,32,8], index: 6, kind: input, shape index: {}]
  %s7 = inlined_call_operand.vmem [shape: f32[4,1,8], index: 7, kind: input, shape index: {}]
  %s8 = inlined_call_operand.vmem [shape: f32[4,8,32], index: 8, kind: input, shape index: {}]
  %s9 = inlined_call_operand.vmem [shape: f32[1,32], index: 9, kind: input, shape index: {}]
  %s10 = inlined_call_operand.vmem [shape: f32[1,32], index: 10, kind: input, shape index: {}]
  %s11 = inlined_call_operand.vmem [shape: f32[1,32], index: 11, kind: input, shape index: {}]
  %s12 = inlined_call_operand.hbm [shape: f32[2,16,32], index: 12, kind: output, shape index: {}]
  %s13 = sld [smem:[#allocation0]]
  $region89: #{tpu_custom_call.1} parent=0
    _
  %s15 = ssub.s32 1, %s13
  %s16 = scalar_select 0, %s15, %s13
  $region1: #{tpu_custom_call.1} parent=0
    #allocation3 [shape = 'u8[16384]{0}', space=vmem, size = 0x4000, scoped, tag = 'output window, operand 0']
    #allocation4 [shape = 's32[2]{0}', space=sflag, size = 0x8, scoped, tag = 'scoped memory for tpu_custom_call.1']
    %17 = vsyncpa [#allocation4], 0
    %s18 = scalar_lea.sflag [#allocation4], 1
    %19 = vsyncpa %s18, 0
    loop: start=0, step=1, limit=10
    $region2: #{tpu_custom_call.1} parent=1 // loop_pre_header
      _
    $region3: #{tpu_custom_call.1} parent=1 // loop_header
      %s21 = sphi 0, %s25
      %p22 = scmp.ge.s32.totalorder %s21, 10
      %s28 = sphi 0, %s40
      %s29 = sphi 0, %s36
      %s30 = sphi 0, %s28
      %s31 = sphi 0, %s29
      %s32 = sphi 0, %s30
      %s33 = sphi 0, %s31
      %s43 = sphi 0, %s45
      %s46 = sphi 0, %s43
      %s47 = sphi 0, %s46
      %s63 = sphi 0, %s47
      %s69 = sphi 0, %s71
      %s72 = sphi 0, %s69
      %s73 = sphi 0, %s72
      %s89 = sphi 0, %s73
      %s95 = sphi 0, %s97
      %s98 = sphi 0, %s95
      %s99 = sphi 0, %s98
      %s115 = sphi 0, %s99
      %s121 = sphi 0, %s123
      %s124 = sphi 0, %s121
      %s125 = sphi 0, %s124
      %s141 = sphi 0, %s125
      %s147 = sphi 0, %s149
      %s150 = sphi 0, %s147
      %s151 = sphi 0, %s150
      %s167 = sphi 0, %s151
      %s173 = sphi 0, %s175
      %s176 = sphi 0, %s173
      %s177 = sphi 0, %s176
      %s193 = sphi 0, %s177
      %s199 = sphi 0, %s201
      %s202 = sphi 0, %s199
      %s203 = sphi 0, %s202
      %s219 = sphi 0, %s203
      %s225 = sphi 0, %s227
      %s228 = sphi 0, %s225
      %s229 = sphi 0, %s228
      %s245 = sphi 0, %s229
      %s251 = sphi 0, %s253
      %s254 = sphi 0, %s251
      %s255 = sphi 0, %s254
      %s271 = sphi 0, %s255
      %s275 = sphi 0, %s275
      %s277 = sphi 0, %s275
      %s278 = sphi 0, %s277
      %s292 = sphi 0, %s278
      %s296 = sphi 0, %s296
      %s298 = sphi 0, %s296
      %s299 = sphi 0, %s298
      %s313 = sphi 0, %s299
      %s317 = sphi 0, %s317
      %s319 = sphi 0, %s317
      %s320 = sphi 0, %s319
      %s334 = sphi 0, %s320
      %s340 = sphi 0, %s342
      %s343 = sphi 0, %s340
      %s344 = sphi 0, %s343
      %s360 = sphi 0, %s344
    $region4: #{tpu_custom_call.1} parent=1 // loop_header_branch
      %24 = sbr.rel (%p22) target = $region8
    $region5: #{tpu_custom_call.1} parent=1 // loop_body
      %s26 = ssub.s32 %s21, 1
      %s27 = ssub.s32 %s21, 2
      %s34 = sadd.s32 1, %s29
      %p35 = scmp.ge.s32.totalorder %s34, 4
      %s36 = scalar_select %p35, 0, %s34
      %s37 = sadd.s32 1, %s28
      %s38 = scalar_select %p35, %s37, %s28
      %p39 = scmp.ge.s32.totalorder %s38, 2
      %s40 = scalar_select %p39, 0, %s38
      %s41 = ssub.s32 %s28, %s40
      %p42 = scmp.eq.s32.totalorder %s41, 0
      %s44 = sadd.s32 %s43, 1
      %s45 = scalar_select %p42, %s43, %s44
      %p48 = pneg %p42
      %p49 = scmp.eq.s32.totalorder %s21, 7
      %p50 = por %p48, %p49
      %p51 = scmp.ne.s32.totalorder %s43, %s46
      %p52 = scmp.eq.s32.totalorder %s21, 0
      %p53 = por %p51, %p52
      %p54 = scmp.ne.s32.totalorder %s43, %s46
      %p55 = scmp.eq.s32.totalorder %s26, 7
      %p56 = por %p54, %p55
      %p57 = scmp.ne.s32.totalorder %s46, %s47
      %p58 = scmp.eq.s32.totalorder %s26, 0
      %p59 = por %p57, %p58
      %p60 = scmp.ne.s32.totalorder %s46, %s47
      %p61 = scmp.eq.s32.totalorder %s27, 7
      %p62 = por %p60, %p61
      %p64 = scmp.ne.s32.totalorder %s47, %s63
      %p65 = scmp.eq.s32.totalorder %s27, 0
      %p66 = por %p64, %p65
      %s67 = ssub.s32 %s28, %s40
      %p68 = scmp.eq.s32.totalorder %s67, 0
      %s70 = sadd.s32 %s69, 1
      %s71 = scalar_select %p68, %s69, %s70
      %p74 = pneg %p68
      %p75 = scmp.eq.s32.totalorder %s21, 7
      %p76 = por %p74, %p75
      %p77 = scmp.ne.s32.totalorder %s69, %s72
      %p78 = scmp.eq.s32.totalorder %s21, 0
      %p79 = por %p77, %p78
      %p80 = scmp.ne.s32.totalorder %s69, %s72
      %p81 = scmp.eq.s32.totalorder %s26, 7
      %p82 = por %p80, %p81
      %p83 = scmp.ne.s32.totalorder %s72, %s73
      %p84 = scmp.eq.s32.totalorder %s26, 0
      %p85 = por %p83, %p84
      %p86 = scmp.ne.s32.totalorder %s72, %s73
      %p87 = scmp.eq.s32.totalorder %s27, 7
      %p88 = por %p86, %p87
      %p90 = scmp.ne.s32.totalorder %s73, %s89
      %p91 = scmp.eq.s32.totalorder %s27, 0
      %p92 = por %p90, %p91
      %s93 = ssub.s32 %s29, %s36
      %p94 = scmp.eq.s32.totalorder %s93, 0
      %s96 = sadd.s32 %s95, 1
      %s97 = scalar_select %p94, %s95, %s96
      %p100 = pneg %p94
      %p101 = scmp.eq.s32.totalorder %s21, 7
      %p102 = por %p100, %p101
      %p103 = scmp.ne.s32.totalorder %s95, %s98
      %p104 = scmp.eq.s32.totalorder %s21, 0
      %p105 = por %p103, %p104
      %p106 = scmp.ne.s32.totalorder %s95, %s98
      %p107 = scmp.eq.s32.totalorder %s26, 7
      %p108 = por %p106, %p107
      %p109 = scmp.ne.s32.totalorder %s98, %s99
      %p110 = scmp.eq.s32.totalorder %s26, 0
      %p111 = por %p109, %p110
      %p112 = scmp.ne.s32.totalorder %s98, %s99
      %p113 = scmp.eq.s32.totalorder %s27, 7
      %p114 = por %p112, %p113
      %p116 = scmp.ne.s32.totalorder %s99, %s115
      %p117 = scmp.eq.s32.totalorder %s27, 0
      %p118 = por %p116, %p117
      %s119 = ssub.s32 %s29, %s36
      %p120 = scmp.eq.s32.totalorder %s119, 0
      %s122 = sadd.s32 %s121, 1
      %s123 = scalar_select %p120, %s121, %s122
      %p126 = pneg %p120
      %p127 = scmp.eq.s32.totalorder %s21, 7
      %p128 = por %p126, %p127
      %p129 = scmp.ne.s32.totalorder %s121, %s124
      %p130 = scmp.eq.s32.totalorder %s21, 0
      %p131 = por %p129, %p130
      %p132 = scmp.ne.s32.totalorder %s121, %s124
      %p133 = scmp.eq.s32.totalorder %s26, 7
      %p134 = por %p132, %p133
      %p135 = scmp.ne.s32.totalorder %s124, %s125
      %p136 = scmp.eq.s32.totalorder %s26, 0
      %p137 = por %p135, %p136
      %p138 = scmp.ne.s32.totalorder %s124, %s125
      %p139 = scmp.eq.s32.totalorder %s27, 7
      %p140 = por %p138, %p139
      %p142 = scmp.ne.s32.totalorder %s125, %s141
      %p143 = scmp.eq.s32.totalorder %s27, 0
      %p144 = por %p142, %p143
      %s145 = ssub.s32 %s29, %s36
      %p146 = scmp.eq.s32.totalorder %s145, 0
      %s148 = sadd.s32 %s147, 1
      %s149 = scalar_select %p146, %s147, %s148
      %p152 = pneg %p146
      %p153 = scmp.eq.s32.totalorder %s21, 7
      %p154 = por %p152, %p153
      %p155 = scmp.ne.s32.totalorder %s147, %s150
      %p156 = scmp.eq.s32.totalorder %s21, 0
      %p157 = por %p155, %p156
      %p158 = scmp.ne.s32.totalorder %s147, %s150
      %p159 = scmp.eq.s32.totalorder %s26, 7
      %p160 = por %p158, %p159
      %p161 = scmp.ne.s32.totalorder %s150, %s151
      %p162 = scmp.eq.s32.totalorder %s26, 0
      %p163 = por %p161, %p162
      %p164 = scmp.ne.s32.totalorder %s150, %s151
      %p165 = scmp.eq.s32.totalorder %s27, 7
      %p166 = por %p164, %p165
      %p168 = scmp.ne.s32.totalorder %s151, %s167
      %p169 = scmp.eq.s32.totalorder %s27, 0
      %p170 = por %p168, %p169
      %s171 = ssub.s32 %s29, %s36
      %p172 = scmp.eq.s32.totalorder %s171, 0
      %s174 = sadd.s32 %s173, 1
      %s175 = scalar_select %p172, %s173, %s174
      %p178 = pneg %p172
      %p179 = scmp.eq.s32.totalorder %s21, 7
      %p180 = por %p178, %p179
      %p181 = scmp.ne.s32.totalorder %s173, %s176
      %p182 = scmp.eq.s32.totalorder %s21, 0
      %p183 = por %p181, %p182
      %p184 = scmp.ne.s32.totalorder %s173, %s176
      %p185 = scmp.eq.s32.totalorder %s26, 7
      %p186 = por %p184, %p185
      %p187 = scmp.ne.s32.totalorder %s176, %s177
      %p188 = scmp.eq.s32.totalorder %s26, 0
      %p189 = por %p187, %p188
      %p190 = scmp.ne.s32.totalorder %s176, %s177
      %p191 = scmp.eq.s32.totalorder %s27, 7
      %p192 = por %p190, %p191
      %p194 = scmp.ne.s32.totalorder %s177, %s193
      %p195 = scmp.eq.s32.totalorder %s27, 0
      %p196 = por %p194, %p195
      %s197 = ssub.s32 %s29, %s36
      %p198 = scmp.eq.s32.totalorder %s197, 0
      %s200 = sadd.s32 %s199, 1
      %s201 = scalar_select %p198, %s199, %s200
      %p204 = pneg %p198
      %p205 = scmp.eq.s32.totalorder %s21, 7
      %p206 = por %p204, %p205
      %p207 = scmp.ne.s32.totalorder %s199, %s202
      %p208 = scmp.eq.s32.totalorder %s21, 0
      %p209 = por %p207, %p208
      %p210 = scmp.ne.s32.totalorder %s199, %s202
      %p211 = scmp.eq.s32.totalorder %s26, 7
      %p212 = por %p210, %p211
      %p213 = scmp.ne.s32.totalorder %s202, %s203
      %p214 = scmp.eq.s32.totalorder %s26, 0
      %p215 = por %p213, %p214
      %p216 = scmp.ne.s32.totalorder %s202, %s203
      %p217 = scmp.eq.s32.totalorder %s27, 7
      %p218 = por %p216, %p217
      %p220 = scmp.ne.s32.totalorder %s203, %s219
      %p221 = scmp.eq.s32.totalorder %s27, 0
      %p222 = por %p220, %p221
      %s223 = ssub.s32 %s29, %s36
      %p224 = scmp.eq.s32.totalorder %s223, 0
      %s226 = sadd.s32 %s225, 1
      %s227 = scalar_select %p224, %s225, %s226
      %p230 = pneg %p224
      %p231 = scmp.eq.s32.totalorder %s21, 7
      %p232 = por %p230, %p231
      %p233 = scmp.ne.s32.totalorder %s225, %s228
      %p234 = scmp.eq.s32.totalorder %s21, 0
      %p235 = por %p233, %p234
      %p236 = scmp.ne.s32.totalorder %s225, %s228
      %p237 = scmp.eq.s32.totalorder %s26, 7
      %p238 = por %p236, %p237
      %p239 = scmp.ne.s32.totalorder %s228, %s229
      %p240 = scmp.eq.s32.totalorder %s26, 0
      %p241 = por %p239, %p240
      %p242 = scmp.ne.s32.totalorder %s228, %s229
      %p243 = scmp.eq.s32.totalorder %s27, 7
      %p244 = por %p242, %p243
      %p246 = scmp.ne.s32.totalorder %s229, %s245
      %p247 = scmp.eq.s32.totalorder %s27, 0
      %p248 = por %p246, %p247
      %s249 = ssub.s32 %s29, %s36
      %p250 = scmp.eq.s32.totalorder %s249, 0
      %s252 = sadd.s32 %s251, 1
      %s253 = scalar_select %p250, %s251, %s252
      %p256 = pneg %p250
      %p257 = scmp.eq.s32.totalorder %s21, 7
      %p258 = por %p256, %p257
      %p259 = scmp.ne.s32.totalorder %s251, %s254
      %p260 = scmp.eq.s32.totalorder %s21, 0
      %p261 = por %p259, %p260
      %p262 = scmp.ne.s32.totalorder %s251, %s254
      %p263 = scmp.eq.s32.totalorder %s26, 7
      %p264 = por %p262, %p263
      %p265 = scmp.ne.s32.totalorder %s254, %s255
      %p266 = scmp.eq.s32.totalorder %s26, 0
      %p267 = por %p265, %p266
      %p268 = scmp.ne.s32.totalorder %s254, %s255
      %p269 = scmp.eq.s32.totalorder %s27, 7
      %p270 = por %p268, %p269
      %p272 = scmp.ne.s32.totalorder %s255, %s271
      %p273 = scmp.eq.s32.totalorder %s27, 0
      %p274 = por %p272, %p273
      %s276 = sadd.s32 %s275, 1
      %p279 = scmp.eq.s32.totalorder %s21, 7
      %p280 = scmp.ne.s32.totalorder %s275, %s277
      %p281 = scmp.eq.s32.totalorder %s21, 0
      %p282 = por %p280, %p281
      %p283 = scmp.ne.s32.totalorder %s275, %s277
      %p284 = scmp.eq.s32.totalorder %s26, 7
      %p285 = por %p283, %p284
      %p286 = scmp.ne.s32.totalorder %s277, %s278
      %p287 = scmp.eq.s32.totalorder %s26, 0
      %p288 = por %p286, %p287
      %p289 = scmp.ne.s32.totalorder %s277, %s278
      %p290 = scmp.eq.s32.totalorder %s27, 7
      %p291 = por %p289, %p290
      %p293 = scmp.ne.s32.totalorder %s278, %s292
      %p294 = scmp.eq.s32.totalorder %s27, 0
      %p295 = por %p293, %p294
      %s297 = sadd.s32 %s296, 1
      %p300 = scmp.eq.s32.totalorder %s21, 7
      %p301 = scmp.ne.s32.totalorder %s296, %s298
      %p302 = scmp.eq.s32.totalorder %s21, 0
      %p303 = por %p301, %p302
      %p304 = scmp.ne.s32.totalorder %s296, %s298
      %p305 = scmp.eq.s32.totalorder %s26, 7
      %p306 = por %p304, %p305
      %p307 = scmp.ne.s32.totalorder %s298, %s299
      %p308 = scmp.eq.s32.totalorder %s26, 0
      %p309 = por %p307, %p308
      %p310 = scmp.ne.s32.totalorder %s298, %s299
      %p311 = scmp.eq.s32.totalorder %s27, 7
      %p312 = por %p310, %p311
      %p314 = scmp.ne.s32.totalorder %s299, %s313
      %p315 = scmp.eq.s32.totalorder %s27, 0
      %p316 = por %p314, %p315
      %s318 = sadd.s32 %s317, 1
      %p321 = scmp.eq.s32.totalorder %s21, 7
      %p322 = scmp.ne.s32.totalorder %s317, %s319
      %p323 = scmp.eq.s32.totalorder %s21, 0
      %p324 = por %p322, %p323
      %p325 = scmp.ne.s32.totalorder %s317, %s319
      %p326 = scmp.eq.s32.totalorder %s26, 7
      %p327 = por %p325, %p326
      %p328 = scmp.ne.s32.totalorder %s319, %s320
      %p329 = scmp.eq.s32.totalorder %s26, 0
      %p330 = por %p328, %p329
      %p331 = scmp.ne.s32.totalorder %s319, %s320
      %p332 = scmp.eq.s32.totalorder %s27, 7
      %p333 = por %p331, %p332
      %p335 = scmp.ne.s32.totalorder %s320, %s334
      %p336 = scmp.eq.s32.totalorder %s27, 0
      %p337 = por %p335, %p336
      %s338 = ssub.s32 %s28, %s40
      %p339 = scmp.eq.s32.totalorder %s338, 0
      %s341 = sadd.s32 %s340, 1
      %s342 = scalar_select %p339, %s340, %s341
      %p345 = pneg %p339
      %p346 = scmp.eq.s32.totalorder %s21, 7
      %p347 = por %p345, %p346
      %p348 = scmp.ne.s32.totalorder %s340, %s343
      %p349 = scmp.eq.s32.totalorder %s21, 0
      %p350 = por %p348, %p349
      %p351 = scmp.ne.s32.totalorder %s340, %s343
      %p352 = scmp.eq.s32.totalorder %s26, 7
      %p353 = por %p351, %p352
      %p354 = scmp.ne.s32.totalorder %s343, %s344
      %p355 = scmp.eq.s32.totalorder %s26, 0
      %p356 = por %p354, %p355
      %p357 = scmp.ne.s32.totalorder %s343, %s344
      %p358 = scmp.eq.s32.totalorder %s27, 7
      %p359 = por %p357, %p358
      %p361 = scmp.ne.s32.totalorder %s344, %s360
      %p362 = scmp.eq.s32.totalorder %s27, 0
      %p363 = por %p361, %p362
      %p364 = scmp.le.s32.totalorder 1, %s21
      %p365 = scmp.lt.s32.totalorder %s21, 9
      %p366 = pnand %p364, %p365
      %p367 = pneg %p366
      // Predicated region
      $region9: #{tpu_custom_call.1} parent=5 // pred_check
        _
      $region10: #{tpu_custom_call.1} parent=5 // pred_check_branch
        %369 = sbr.rel (%p366) target = $region12
      $region11: #{tpu_custom_call.1} parent=5 // pred_region
        %s370 = ssub.s32 %s21, 1
        // Predicated region
        $region13: #{tpu_custom_call.1} parent=11 // pred_check
          %p371 = pneg %p288
        $region14: #{tpu_custom_call.1} parent=11 // pred_check_branch
          %373 = sbr.rel (%p371) target = $region16
        $region15: #{tpu_custom_call.1} parent=11 // pred_region
          _
        $region16: #{tpu_custom_call.1} parent=11 // pred_fallthru
          _
        // Predicated region
        $region17: #{tpu_custom_call.1} parent=11 // pred_check
          %p374 = pneg %p309
        $region18: #{tpu_custom_call.1} parent=11 // pred_check_branch
          %376 = sbr.rel (%p374) target = $region20
        $region19: #{tpu_custom_call.1} parent=11 // pred_region
          _
        $region20: #{tpu_custom_call.1} parent=11 // pred_fallthru
          _
        // Predicated region
        $region21: #{tpu_custom_call.1} parent=11 // pred_check
          %p377 = pneg %p330
        $region22: #{tpu_custom_call.1} parent=11 // pred_check_branch
          %379 = sbr.rel (%p377) target = $region24
        $region23: #{tpu_custom_call.1} parent=11 // pred_region
          _
        $region24: #{tpu_custom_call.1} parent=11 // pred_fallthru
          _
      $region12: #{tpu_custom_call.1} parent=5 // pred_fallthru
        _
      %p380 = scmp.lt.s32.totalorder %s21, 8
      // Predicated region
      $region25: #{tpu_custom_call.1} parent=5 // pred_check
        %p381 = pneg %p380
      $region26: #{tpu_custom_call.1} parent=5 // pred_check_branch
        %383 = sbr.rel (%p381) target = $region28
      $region27: #{tpu_custom_call.1} parent=5 // pred_region
        // Predicated region
        $region29: #{tpu_custom_call.1} parent=27 // pred_check
          %p384 = pneg %p53
        $region30: #{tpu_custom_call.1} parent=27 // pred_check_branch
          %386 = sbr.rel (%p384) target = $region32
        $region31: #{tpu_custom_call.1} parent=27 // pred_region
          %p387 = scmp.lt.s32.totalorder %s28, 1
          %s388 = scalar_select %p387, %s28, 1
          %s389 = smul.addr %s388, 2
          %s390 = smul.addr %s389, 8
          %s391 = scalar_lea.vmem %s0, %s390
        $region32: #{tpu_custom_call.1} parent=27 // pred_fallthru
          _
        // Predicated region
        $region33: #{tpu_custom_call.1} parent=27 // pred_check
          %p392 = pneg %p79
        $region34: #{tpu_custom_call.1} parent=27 // pred_check_branch
          %394 = sbr.rel (%p392) target = $region36
        $region35: #{tpu_custom_call.1} parent=27 // pred_region
          %p395 = scmp.lt.s32.totalorder %s28, 1
          %s396 = scalar_select %p395, %s28, 1
          %s397 = smul.addr %s396, 2
          %s398 = smul.addr %s397, 8
          %s399 = scalar_lea.vmem %s1, %s398
        $region36: #{tpu_custom_call.1} parent=27 // pred_fallthru
          _
        // Predicated region
        $region37: #{tpu_custom_call.1} parent=27 // pred_check
          %p400 = pneg %p105
        $region38: #{tpu_custom_call.1} parent=27 // pred_check_branch
          %402 = sbr.rel (%p400) target = $region40
        $region39: #{tpu_custom_call.1} parent=27 // pred_region
          %p403 = scmp.lt.s32.totalorder %s29, 3
          %s404 = scalar_select %p403, %s29, 3
          %s405 = smul.addr %s404, 4
          %s406 = smul.addr %s405, 8
          %s407 = scalar_lea.vmem %s2, %s406
        $region40: #{tpu_custom_call.1} parent=27 // pred_fallthru
          _
        // Predicated region
        $region41: #{tpu_custom_call.1} parent=27 // pred_check
          %p408 = pneg %p131
        $region42: #{tpu_custom_call.1} parent=27 // pred_check_branch
          %410 = sbr.rel (%p408) target = $region44
        $region43: #{tpu_custom_call.1} parent=27 // pred_region
          %p411 = scmp.lt.s32.totalorder %s29, 3
          %s412 = scalar_select %p411, %s29, 3
          %s413 = scalar_lea.vmem %s3, %s412
        $region44: #{tpu_custom_call.1} parent=27 // pred_fallthru
          _
        // Predicated region
        $region45: #{tpu_custom_call.1} parent=27 // pred_check
          %p414 = pneg %p157
        $region46: #{tpu_custom_call.1} parent=27 // pred_check_branch
          %416 = sbr.rel (%p414) target = $region48
        $region47: #{tpu_custom_call.1} parent=27 // pred_region
          %p417 = scmp.lt.s32.totalorder %s29, 3
          %s418 = scalar_select %p417, %s29, 3
          %s419 = smul.addr %s418, 4
          %s420 = smul.addr %s419, 8
          %s421 = scalar_lea.vmem %s4, %s420
        $region48: #{tpu_custom_call.1} parent=27 // pred_fallthru
          _
        // Predicated region
        $region49: #{tpu_custom_call.1} parent=27 // pred_check
          %p422 = pneg %p183
        $region50: #{tpu_custom_call.1} parent=27 // pred_check_branch
          %424 = sbr.rel (%p422) target = $region52
        $region51: #{tpu_custom_call.1} parent=27 // pred_region
          %p425 = scmp.lt.s32.totalorder %s29, 3
          %s426 = scalar_select %p425, %s29, 3
          %s427 = scalar_lea.vmem %s5, %s426
        $region52: #{tpu_custom_call.1} parent=27 // pred_fallthru
          _
        // Predicated region
        $region53: #{tpu_custom_call.1} parent=27 // pred_check
          %p428 = pneg %p209
        $region54: #{tpu_custom_call.1} parent=27 // pred_check_branch
          %430 = sbr.rel (%p428) target = $region56
        $region55: #{tpu_custom_call.1} parent=27 // pred_region
          %p431 = scmp.lt.s32.totalorder %s29, 3
          %s432 = scalar_select %p431, %s29, 3
          %s433 = smul.addr %s432, 4
          %s434 = smul.addr %s433, 8
          %s435 = scalar_lea.vmem %s6, %s434
        $region56: #{tpu_custom_call.1} parent=27 // pred_fallthru
          _
        // Predicated region
        $region57: #{tpu_custom_call.1} parent=27 // pred_check
          %p436 = pneg %p235
        $region58: #{tpu_custom_call.1} parent=27 // pred_check_branch
          %438 = sbr.rel (%p436) target = $region60
        $region59: #{tpu_custom_call.1} parent=27 // pred_region
          %p439 = scmp.lt.s32.totalorder %s29, 3
          %s440 = scalar_select %p439, %s29, 3
          %s441 = scalar_lea.vmem %s7, %s440
        $region60: #{tpu_custom_call.1} parent=27 // pred_fallthru
          _
        // Predicated region
        $region61: #{tpu_custom_call.1} parent=27 // pred_check
          %p442 = pneg %p261
        $region62: #{tpu_custom_call.1} parent=27 // pred_check_branch
          %444 = sbr.rel (%p442) target = $region64
        $region63: #{tpu_custom_call.1} parent=27 // pred_region
          %p445 = scmp.lt.s32.totalorder %s29, 3
          %s446 = scalar_select %p445, %s29, 3
          %s447 = smul.addr %s446, 8
          %s448 = scalar_lea.vmem %s8, %s447
        $region64: #{tpu_custom_call.1} parent=27 // pred_fallthru
          _
      $region28: #{tpu_custom_call.1} parent=5 // pred_fallthru
        _
      %p449 = scmp.le.s32.totalorder 1, %s21
      %p450 = scmp.lt.s32.totalorder %s21, 9
      %p451 = pnand %p449, %p450
      %p452 = pneg %p451
      // Predicated region
      $region65: #{tpu_custom_call.1} parent=5 // pred_check
        _
      $region66: #{tpu_custom_call.1} parent=5 // pred_check_branch
        %454 = sbr.rel (%p451) target = $region68
      $region67: #{tpu_custom_call.1} parent=5 // pred_region
        %s455 = ssub.s32 %s21, 1
        %p456 = scmp.lt.s32.totalorder %s30, 1
        %s457 = scalar_select %p456, %s30, 1
        %s458 = smul.addr %s457, 2
        %s459 = smul.addr %s458, 8
        %s460 = scalar_lea.vmem %s0, %s459
        %p461 = pneg %p59
        %p462 = pneg %p56
        %p463 = scmp.lt.s32.totalorder %s30, 1
        %s464 = scalar_select %p463, %s30, 1
        %s465 = smul.addr %s464, 2
        %s466 = smul.addr %s465, 8
        %s467 = scalar_lea.vmem %s1, %s466
        %p468 = pneg %p85
        %p469 = pneg %p82
        %p470 = scmp.lt.s32.totalorder %s31, 3
        %s471 = scalar_select %p470, %s31, 3
        %s472 = smul.addr %s471, 4
        %s473 = smul.addr %s472, 8
        %s474 = scalar_lea.vmem %s2, %s473
        %p475 = pneg %p111
        %p476 = pneg %p108
        %p477 = scmp.lt.s32.totalorder %s31, 3
        %s478 = scalar_select %p477, %s31, 3
        %s479 = scalar_lea.vmem %s3, %s478
        %p480 = pneg %p137
        %p481 = pneg %p134
        %p482 = scmp.lt.s32.totalorder %s31, 3
        %s483 = scalar_select %p482, %s31, 3
        %s484 = smul.addr %s483, 4
        %s485 = smul.addr %s484, 8
        %s486 = scalar_lea.vmem %s4, %s485
        %p487 = pneg %p163
        %p488 = pneg %p160
        %p489 = scmp.lt.s32.totalorder %s31, 3
        %s490 = scalar_select %p489, %s31, 3
        %s491 = scalar_lea.vmem %s5, %s490
        %p492 = pneg %p189
        %p493 = pneg %p186
        %p494 = scmp.lt.s32.totalorder %s31, 3
        %s495 = scalar_select %p494, %s31, 3
        %s496 = smul.addr %s495, 4
        %s497 = smul.addr %s496, 8
        %s498 = scalar_lea.vmem %s6, %s497
        %p499 = pneg %p215
        %p500 = pneg %p212
        %p501 = scmp.lt.s32.totalorder %s31, 3
        %s502 = scalar_select %p501, %s31, 3
        %s503 = scalar_lea.vmem %s7, %s502
        %p504 = pneg %p241
        %p505 = pneg %p238
        %p506 = scmp.lt.s32.totalorder %s31, 3
        %s507 = scalar_select %p506, %s31, 3
        %s508 = smul.addr %s507, 8
        %s509 = scalar_lea.vmem %s8, %s508
        %p510 = pneg %p267
        %p511 = pneg %p264
        %p512 = pneg %p288
        %p513 = pneg %p285
        %p514 = pneg %p309
        %p515 = pneg %p306
        %p516 = pneg %p330
        %p517 = pneg %p327
        %p518 = pneg %p356
        %p519 = pneg %p353
        %s520 = sand.u32 %s343, 1
        %s521 = scalar_lea.sflag [#allocation4], %s520
        %s522 = sand.u32 %s343, 1
        %s523 = smul.addr %s522, 16
        %s524 = scalar_lea.vmem [#allocation3], %s523
        %p525 = scmp.lt.s32.totalorder %s30, 1
        %s526 = scalar_select %p525, %s30, 1
        %s527 = smul.addr %s526, 2
        %s528 = smul.addr %s527, 8
        %s529 = scalar_lea.vmem %s0, %s528
        %p530 = scmp.lt.s32.totalorder %s30, 1
        %s531 = scalar_select %p530, %s30, 1
        %s532 = smul.addr %s531, 2
        %s533 = smul.addr %s532, 8
        %s534 = scalar_lea.vmem %s1, %s533
        %p535 = scmp.lt.s32.totalorder %s31, 3
        %s536 = scalar_select %p535, %s31, 3
        %s537 = smul.addr %s536, 4
        %s538 = smul.addr %s537, 8
        %s539 = scalar_lea.vmem %s2, %s538
        %p540 = scmp.lt.s32.totalorder %s31, 3
        %s541 = scalar_select %p540, %s31, 3
        %s542 = scalar_lea.vmem %s3, %s541
        %p543 = scmp.lt.s32.totalorder %s31, 3
        %s544 = scalar_select %p543, %s31, 3
        %s545 = smul.addr %s544, 4
        %s546 = smul.addr %s545, 8
        %s547 = scalar_lea.vmem %s4, %s546
        %p548 = scmp.lt.s32.totalorder %s31, 3
        %s549 = scalar_select %p548, %s31, 3
        %s550 = scalar_lea.vmem %s5, %s549
        %p551 = scmp.lt.s32.totalorder %s31, 3
        %s552 = scalar_select %p551, %s31, 3
        %s553 = smul.addr %s552, 4
        %s554 = smul.addr %s553, 8
        %s555 = scalar_lea.vmem %s6, %s554
        %p556 = scmp.lt.s32.totalorder %s31, 3
        %s557 = scalar_select %p556, %s31, 3
        %s558 = scalar_lea.vmem %s7, %s557
        %p559 = scmp.lt.s32.totalorder %s31, 3
        %s560 = scalar_select %p559, %s31, 3
        %s561 = smul.addr %s560, 8
        %s562 = scalar_lea.vmem %s8, %s561
        %p563 = scmp.eq.s32.totalorder %s31, 0
        // Predicated region
        $region69: #{tpu_custom_call.1} parent=67 // pred_check
          %p564 = pneg %p563
        $region70: #{tpu_custom_call.1} parent=67 // pred_check_branch
          %566 = sbr.rel (%p564) target = $region72
        $region71: #{tpu_custom_call.1} parent=67 // pred_region
          %vm567 = vcmask 261120
          %568 = vst.msk [vmem:[#allocation2] sm:$0xff] %vm567, 0.0
          %569 = vst.msk [vmem:[#allocation2 + $0x8] sm:$0xff] %vm567, 0.0
        $region72: #{tpu_custom_call.1} parent=67 // pred_fallthru
          _
        %v570 = vld [vmem:[%s529] sm:$0xff]
        %v571 = vld [vmem:[%s529 + $0x8] sm:$0xff]
        %v572 = vld [vmem:[%s534] sm:$0xff]
        %v573 = vld [vmem:[%s534 + $0x8] sm:$0xff]
        %v574 = vadd.f32 %v570, %v572
        %v575 = vadd.f32 %v571, %v573
        %v576 = vld [vmem:[%s539] sm:$0xff]
        %v577 = vld [vmem:[%s539 + $0x8] sm:$0xff]
        %v578 = vld [vmem:[%s539 + $0x10] sm:$0xff]
        %v579 = vld [vmem:[%s539 + $0x18] sm:$0xff]
        %v580 = vld [vmem:[%s542] sm:$0x1]
        %v582 = vlaneseq
        %v583 = vshrl.u32 %v582, 7
        %v584 = vsub.s32 0, %v583
        %v585 = vrot.slane %v580, %v584
        %vm587 = vcmask 261120
        %v589 = vsel %vm587, %v574, 0
        %v592 = vsel %vm587, %v575, 0
        %594 = vmatprep.subr.mxu0 0.0
        %595 = vmatpush1.msra.mxu0 0.0
        %596 = vmatprep.subr.mxu0 0.0
        %597 = vmatpush1.msra.mxu0 0.0
        %598 = vmatprep.subr.mxu0 0.0
        %599 = vmatpush1.msra.mxu0 0.0
        %600 = vmatprep.subr.mxu0 0.0
        %601 = vmatpush1.msra.mxu0 0.0
        %602 = vmatprep.subr.mxu0 0.0
        %603 = vmatpush1.msra.mxu0 0.0
        %604 = vmatprep.subr.mxu0 0.0
        %605 = vmatpush1.msra.mxu0 0.0
        %606 = vmatprep.subr.mxu0 0.0
        %607 = vmatpush1.msra.mxu0 0.0
        %608 = vmatprep.subr.mxu0 0.0
        %609 = vmatpush1.msra.mxu0 0.0
        %610 = vmatprep.subr.mxu0 0.0
        %611 = vmatpush1.msra.mxu0 0.0
        %612 = vmatprep.subr.mxu0 0.0
        %613 = vmatpush1.msra.mxu0 0.0
        %614 = vmatprep.subr.mxu0 0.0
        %615 = vmatpush1.msra.mxu0 0.0
        %616 = vmatprep.subr.mxu0 0.0
        %617 = vmatpush1.msra.mxu0 0.0
        %618 = vmatprep.subr.mxu0 0.0
        %619 = vmatpush1.msra.mxu0 %v579
        %620 = vmatprep.subr.mxu0 0.0
        %621 = vmatpush1.msra.mxu0 %v578
        %622 = vmatprep.subr.mxu0 0.0
        %623 = vmatpush1.msra.mxu0 %v577
        %624 = vmatprep.subr.mxu0 0.0
        %625 = vmatpush1.msra.mxu0 %v576
        %626 = vmatprep.subr.mxu0 0.0
        %627 = vmatpush2.msra.mxu0 0.0
        %628 = vmatprep.subr.mxu0 0.0
        %629 = vmatpush2.msra.mxu0 0.0
        %630 = vmatprep.subr.mxu0 0.0
        %631 = vmatpush2.msra.mxu0 0.0
        %632 = vmatprep.subr.mxu0 0.0
        %633 = vmatpush2.msra.mxu0 0.0
        %634 = vmatprep.subr.mxu0 0.0
        %635 = vmatpush2.msra.mxu0 0.0
        %636 = vmatprep.subr.mxu0 0.0
        %637 = vmatpush2.msra.mxu0 0.0
        %638 = vmatprep.subr.mxu0 0.0
        %639 = vmatpush2.msra.mxu0 0.0
        %640 = vmatprep.subr.mxu0 0.0
        %641 = vmatpush2.msra.mxu0 0.0
        %642 = vmatprep.subr.mxu0 0.0
        %643 = vmatpush2.msra.mxu0 0.0
        %644 = vmatprep.subr.mxu0 0.0
        %645 = vmatpush2.msra.mxu0 0.0
        %646 = vmatprep.subr.mxu0 0.0
        %647 = vmatpush2.msra.mxu0 0.0
        %648 = vmatprep.subr.mxu0 0.0
        %649 = vmatpush2.msra.mxu0 0.0
        %650 = vmatprep.subr.mxu0 0.0
        %651 = vmatpush2.msra.mxu0 0.0
        %652 = vmatprep.subr.mxu0 0.0
        %653 = vmatpush2.msra.mxu0 0.0
        %654 = vmatprep.subr.mxu0 0.0
        %655 = vmatpush2.msra.mxu0 0.0
        %656 = vmatprep.subr.mxu0 0.0
        %657 = vmatpush2.msra.mxu0 0.0
        %658 = vmatprep.mubr.f32.mxu0 0.0
        %659 = vmatmul.mubr.f32.gmra.mxu0 %v589
        %v660 = vpop.f32.mrf.mxu0
        %v661 = vadd.f32 %v585, %v660
        %v662 = vpop.f32.mrf.mxu0
        %663 = vmatprep.mubr.f32.mxu0 0.0
        %664 = vmatmul.mubr.f32.gmra.mxu0 %v592
        %v665 = vpop.f32.mrf.mxu0
        %v666 = vadd.f32 %v585, %v665
        %v667 = vpop.f32.mrf.mxu0
        %668 = vdwg.mxu0
        %v669 = vld [vmem:[%s547] sm:$0xff]
        %v670 = vld [vmem:[%s547 + $0x8] sm:$0xff]
        %v671 = vld [vmem:[%s547 + $0x10] sm:$0xff]
        %v672 = vld [vmem:[%s547 + $0x18] sm:$0xff]
        %v673 = vld [vmem:[%s550] sm:$0x1]
        %v675 = vlaneseq
        %v676 = vshrl.u32 %v675, 7
        %v677 = vsub.s32 0, %v676
        %v678 = vrot.slane %v673, %v677
        %680 = vmatprep.subr.mxu0 0.0
        %681 = vmatpush1.msra.mxu0 0.0
        %682 = vmatprep.subr.mxu0 0.0
        %683 = vmatpush1.msra.mxu0 0.0
        %684 = vmatprep.subr.mxu0 0.0
        %685 = vmatpush1.msra.mxu0 0.0
        %686 = vmatprep.subr.mxu0 0.0
        %687 = vmatpush1.msra.mxu0 0.0
        %688 = vmatprep.subr.mxu0 0.0
        %689 = vmatpush1.msra.mxu0 0.0
        %690 = vmatprep.subr.mxu0 0.0
        %691 = vmatpush1.msra.mxu0 0.0
        %692 = vmatprep.subr.mxu0 0.0
        %693 = vmatpush1.msra.mxu0 0.0
        %694 = vmatprep.subr.mxu0 0.0
        %695 = vmatpush1.msra.mxu0 0.0
        %696 = vmatprep.subr.mxu0 0.0
        %697 = vmatpush1.msra.mxu0 0.0
        %698 = vmatprep.subr.mxu0 0.0
        %699 = vmatpush1.msra.mxu0 0.0
        %700 = vmatprep.subr.mxu0 0.0
        %701 = vmatpush1.msra.mxu0 0.0
        %702 = vmatprep.subr.mxu0 0.0
        %703 = vmatpush1.msra.mxu0 0.0
        %704 = vmatprep.subr.mxu0 0.0
        %705 = vmatpush1.msra.mxu0 %v672
        %706 = vmatprep.subr.mxu0 0.0
        %707 = vmatpush1.msra.mxu0 %v671
        %708 = vmatprep.subr.mxu0 0.0
        %709 = vmatpush1.msra.mxu0 %v670
        %710 = vmatprep.subr.mxu0 0.0
        %711 = vmatpush1.msra.mxu0 %v669
        %712 = vmatprep.subr.mxu0 0.0
        %713 = vmatpush2.msra.mxu0 0.0
        %714 = vmatprep.subr.mxu0 0.0
        %715 = vmatpush2.msra.mxu0 0.0
        %716 = vmatprep.subr.mxu0 0.0
        %717 = vmatpush2.msra.mxu0 0.0
        %718 = vmatprep.subr.mxu0 0.0
        %719 = vmatpush2.msra.mxu0 0.0
        %720 = vmatprep.subr.mxu0 0.0
        %721 = vmatpush2.msra.mxu0 0.0
        %722 = vmatprep.subr.mxu0 0.0
        %723 = vmatpush2.msra.mxu0 0.0
        %724 = vmatprep.subr.mxu0 0.0
        %725 = vmatpush2.msra.mxu0 0.0
        %726 = vmatprep.subr.mxu0 0.0
        %727 = vmatpush2.msra.mxu0 0.0
        %728 = vmatprep.subr.mxu0 0.0
        %729 = vmatpush2.msra.mxu0 0.0
        %730 = vmatprep.subr.mxu0 0.0
        %731 = vmatpush2.msra.mxu0 0.0
        %732 = vmatprep.subr.mxu0 0.0
        %733 = vmatpush2.msra.mxu0 0.0
        %734 = vmatprep.subr.mxu0 0.0
        %735 = vmatpush2.msra.mxu0 0.0
        %736 = vmatprep.subr.mxu0 0.0
        %737 = vmatpush2.msra.mxu0 0.0
        %738 = vmatprep.subr.mxu0 0.0
        %739 = vmatpush2.msra.mxu0 0.0
        %740 = vmatprep.subr.mxu0 0.0
        %741 = vmatpush2.msra.mxu0 0.0
        %742 = vmatprep.subr.mxu0 0.0
        %743 = vmatpush2.msra.mxu0 0.0
        %744 = vmatprep.mubr.f32.mxu0 0.0
        %745 = vmatmul.mubr.f32.gmra.mxu0 %v589
        %v746 = vpop.f32.mrf.mxu0
        %v747 = vadd.f32 %v678, %v746
        %v748 = vpop.f32.mrf.mxu0
        %749 = vmatprep.mubr.f32.mxu0 0.0
        %750 = vmatmul.mubr.f32.gmra.mxu0 %v592
        %v751 = vpop.f32.mrf.mxu0
        %v752 = vadd.f32 %v678, %v751
        %v753 = vpop.f32.mrf.mxu0
        %754 = vdwg.mxu0
        %v755 = vld [vmem:[%s555] sm:$0xff]
        %v756 = vld [vmem:[%s555 + $0x8] sm:$0xff]
        %v757 = vld [vmem:[%s555 + $0x10] sm:$0xff]
        %v758 = vld [vmem:[%s555 + $0x18] sm:$0xff]
        %v759 = vld [vmem:[%s558] sm:$0x1]
        %v761 = vlaneseq
        %v762 = vshrl.u32 %v761, 7
        %v763 = vsub.s32 0, %v762
        %v764 = vrot.slane %v759, %v763
        %v767 = vsel %vm587, %v570, 0
        %v770 = vsel %vm587, %v571, 0
        %772 = vmatprep.subr.mxu0 0.0
        %773 = vmatpush1.msra.mxu0 0.0
        %774 = vmatprep.subr.mxu0 0.0
        %775 = vmatpush1.msra.mxu0 0.0
        %776 = vmatprep.subr.mxu0 0.0
        %777 = vmatpush1.msra.mxu0 0.0
        %778 = vmatprep.subr.mxu0 0.0
        %779 = vmatpush1.msra.mxu0 0.0
        %780 = vmatprep.subr.mxu0 0.0
        %781 = vmatpush1.msra.mxu0 0.0
        %782 = vmatprep.subr.mxu0 0.0
        %783 = vmatpush1.msra.mxu0 0.0
        %784 = vmatprep.subr.mxu0 0.0
        %785 = vmatpush1.msra.mxu0 0.0
        %786 = vmatprep.subr.mxu0 0.0
        %787 = vmatpush1.msra.mxu0 0.0
        %788 = vmatprep.subr.mxu0 0.0
        %789 = vmatpush1.msra.mxu0 0.0
        %790 = vmatprep.subr.mxu0 0.0
        %791 = vmatpush1.msra.mxu0 0.0
        %792 = vmatprep.subr.mxu0 0.0
        %793 = vmatpush1.msra.mxu0 0.0
        %794 = vmatprep.subr.mxu0 0.0
        %795 = vmatpush1.msra.mxu0 0.0
        %796 = vmatprep.subr.mxu0 0.0
        %797 = vmatpush1.msra.mxu0 %v758
        %798 = vmatprep.subr.mxu0 0.0
        %799 = vmatpush1.msra.mxu0 %v757
        %800 = vmatprep.subr.mxu0 0.0
        %801 = vmatpush1.msra.mxu0 %v756
        %802 = vmatprep.subr.mxu0 0.0
        %803 = vmatpush1.msra.mxu0 %v755
        %804 = vmatprep.subr.mxu0 0.0
        %805 = vmatpush2.msra.mxu0 0.0
        %806 = vmatprep.subr.mxu0 0.0
        %807 = vmatpush2.msra.mxu0 0.0
        %808 = vmatprep.subr.mxu0 0.0
        %809 = vmatpush2.msra.mxu0 0.0
        %810 = vmatprep.subr.mxu0 0.0
        %811 = vmatpush2.msra.mxu0 0.0
        %812 = vmatprep.subr.mxu0 0.0
        %813 = vmatpush2.msra.mxu0 0.0
        %814 = vmatprep.subr.mxu0 0.0
        %815 = vmatpush2.msra.mxu0 0.0
        %816 = vmatprep.subr.mxu0 0.0
        %817 = vmatpush2.msra.mxu0 0.0
        %818 = vmatprep.subr.mxu0 0.0
        %819 = vmatpush2.msra.mxu0 0.0
        %820 = vmatprep.subr.mxu0 0.0
        %821 = vmatpush2.msra.mxu0 0.0
        %822 = vmatprep.subr.mxu0 0.0
        %823 = vmatpush2.msra.mxu0 0.0
        %824 = vmatprep.subr.mxu0 0.0
        %825 = vmatpush2.msra.mxu0 0.0
        %826 = vmatprep.subr.mxu0 0.0
        %827 = vmatpush2.msra.mxu0 0.0
        %828 = vmatprep.subr.mxu0 0.0
        %829 = vmatpush2.msra.mxu0 0.0
        %830 = vmatprep.subr.mxu0 0.0
        %831 = vmatpush2.msra.mxu0 0.0
        %832 = vmatprep.subr.mxu0 0.0
        %833 = vmatpush2.msra.mxu0 0.0
        %834 = vmatprep.subr.mxu0 0.0
        %835 = vmatpush2.msra.mxu0 0.0
        %836 = vmatprep.mubr.f32.mxu0 0.0
        %837 = vmatmul.mubr.f32.gmra.mxu0 %v767
        %v838 = vpop.f32.mrf.mxu0
        %v839 = vadd.f32 %v764, %v838
        %v840 = vpop.f32.mrf.mxu0
        %841 = vmatprep.mubr.f32.mxu0 0.0
        %842 = vmatmul.mubr.f32.gmra.mxu0 %v770
        %v843 = vpop.f32.mrf.mxu0
        %v844 = vadd.f32 %v764, %v843
        %v845 = vpop.f32.mrf.mxu0
        %846 = vdwg.mxu0
        %vm847 = vcmask 64512
        %v849 = vsel %vm847, %v661, 0
        %v852 = vsel %vm847, %v666, 0
        %v855 = vsel %vm847, %v747, 0
        %v858 = vsel %vm847, %v752, 0
        %860 = vmatprep.subr.mxu0 0.0
        %861 = vmatpush1.xpose.msra.mxu0 0.0
        %862 = vmatprep.subr.mxu0 0.0
        %863 = vmatpush1.xpose.msra.mxu0 0.0
        %864 = vmatprep.subr.mxu0 0.0
        %865 = vmatpush1.xpose.msra.mxu0 0.0
        %866 = vmatprep.subr.mxu0 0.0
        %867 = vmatpush1.xpose.msra.mxu0 0.0
        %868 = vmatprep.subr.mxu0 0.0
        %869 = vmatpush1.xpose.msra.mxu0 0.0
        %870 = vmatprep.subr.mxu0 0.0
        %871 = vmatpush1.xpose.msra.mxu0 0.0
        %872 = vmatprep.subr.mxu0 0.0
        %873 = vmatpush1.xpose.msra.mxu0 0.0
        %874 = vmatprep.subr.mxu0 0.0
        %875 = vmatpush1.xpose.msra.mxu0 0.0
        %876 = vmatprep.subr.mxu0 0.0
        %877 = vmatpush1.xpose.msra.mxu0 0.0
        %878 = vmatprep.subr.mxu0 0.0
        %879 = vmatpush1.xpose.msra.mxu0 0.0
        %880 = vmatprep.subr.mxu0 0.0
        %881 = vmatpush1.xpose.msra.mxu0 0.0
        %882 = vmatprep.subr.mxu0 0.0
        %883 = vmatpush1.xpose.msra.mxu0 0.0
        %884 = vmatprep.subr.mxu0 0.0
        %885 = vmatpush1.xpose.msra.mxu0 0.0
        %886 = vmatprep.subr.mxu0 0.0
        %887 = vmatpush1.xpose.msra.mxu0 0.0
        %888 = vmatprep.subr.mxu0 0.0
        %889 = vmatpush1.xpose.msra.mxu0 %v858
        %890 = vmatprep.subr.mxu0 0.0
        %891 = vmatpush1.xpose.msra.mxu0 %v855
        %892 = vmatprep.subr.mxu0 0.0
        %893 = vmatpush2.xpose.msra.mxu0 0.0
        %894 = vmatprep.subr.mxu0 0.0
        %895 = vmatpush2.xpose.msra.mxu0 0.0
        %896 = vmatprep.subr.mxu0 0.0
        %897 = vmatpush2.xpose.msra.mxu0 0.0
        %898 = vmatprep.subr.mxu0 0.0
        %899 = vmatpush2.xpose.msra.mxu0 0.0
        %900 = vmatprep.subr.mxu0 0.0
        %901 = vmatpush2.xpose.msra.mxu0 0.0
        %902 = vmatprep.subr.mxu0 0.0
        %903 = vmatpush2.xpose.msra.mxu0 0.0
        %904 = vmatprep.subr.mxu0 0.0
        %905 = vmatpush2.xpose.msra.mxu0 0.0
        %906 = vmatprep.subr.mxu0 0.0
        %907 = vmatpush2.xpose.msra.mxu0 0.0
        %908 = vmatprep.subr.mxu0 0.0
        %909 = vmatpush2.xpose.msra.mxu0 0.0
        %910 = vmatprep.subr.mxu0 0.0
        %911 = vmatpush2.xpose.msra.mxu0 0.0
        %912 = vmatprep.subr.mxu0 0.0
        %913 = vmatpush2.xpose.msra.mxu0 0.0
        %914 = vmatprep.subr.mxu0 0.0
        %915 = vmatpush2.xpose.msra.mxu0 0.0
        %916 = vmatprep.subr.mxu0 0.0
        %917 = vmatpush2.xpose.msra.mxu0 0.0
        %918 = vmatprep.subr.mxu0 0.0
        %919 = vmatpush2.xpose.msra.mxu0 0.0
        %920 = vmatprep.subr.mxu0 0.0
        %921 = vmatpush2.xpose.msra.mxu0 0.0
        %922 = vmatprep.subr.mxu0 0.0
        %923 = vmatpush2.xpose.msra.mxu0 0.0
        %924 = vmatprep.mubr.f32.mxu0 0.0
        %925 = vmatmul.mubr.f32.gmra.mxu0 %v849
        %v926 = vpop.f32.mrf.mxu0
        %v927 = vadd.f32 0.0, %v926
        %v928 = vpop.f32.mrf.mxu0
        %929 = vmatprep.mubr.f32.mxu0 0.0
        %930 = vmatmul.mubr.f32.gmra.mxu0 %v852
        %v931 = vpop.f32.mrf.mxu0
        %v932 = vadd.f32 0.0, %v931
        %v933 = vpop.f32.mrf.mxu0
        %934 = vdwg.mxu0
        %v935 = vmul.f32 %v927, 0.35355338
        %v936 = vmul.f32 %v932, 0.35355338
        %vm937 = vcmask 130048
        %v938 = vsel %vm937, %v935, -inf
        %939 = vmax.xlane.f32.xlu0 %v938
        %v940 = vpop.xlane.xlu0 %939
        %v941 = vsel %vm937, %v936, -inf
        %942 = vmax.xlane.f32.xlu0 %v941
        %v943 = vpop.xlane.xlu0 %942
        %v944 = vsub.f32 %v935, %v940
        %v945 = vsub.f32 %v936, %v943
        %v946 = vmul.f32 %v944, 1.442695
        %v947 = vpow.pop %v946
        %v948 = vmul.f32 %v945, 1.442695
        %v949 = vpow.pop %v948
        %v950 = vsel %vm937, %v947, 0.0
        %951 = vadd.xlane.f32.xlu0 %v950
        %v952 = vpop.xlane.xlu0 %951
        %v953 = vsel %vm937, %v949, 0.0
        %954 = vadd.xlane.f32.xlu0 %v953
        %v955 = vpop.xlane.xlu0 %954
        %v957 = vsel %vm937, %v947, 0
        %v960 = vsel %vm937, %v949, 0
        %962 = vmatprep.subr.mxu0 0.0
        %963 = vmatpush1.msra.mxu0 0.0
        %964 = vmatprep.subr.mxu0 0.0
        %965 = vmatpush1.msra.mxu0 0.0
        %966 = vmatprep.subr.mxu0 0.0
        %967 = vmatpush1.msra.mxu0 0.0
        %968 = vmatprep.subr.mxu0 0.0
        %969 = vmatpush1.msra.mxu0 0.0
        %970 = vmatprep.subr.mxu0 0.0
        %971 = vmatpush1.msra.mxu0 0.0
        %972 = vmatprep.subr.mxu0 0.0
        %973 = vmatpush1.msra.mxu0 0.0
        %974 = vmatprep.subr.mxu0 0.0
        %975 = vmatpush1.msra.mxu0 0.0
        %976 = vmatprep.subr.mxu0 0.0
        %977 = vmatpush1.msra.mxu0 0.0
        %978 = vmatprep.subr.mxu0 0.0
        %979 = vmatpush1.msra.mxu0 0.0
        %980 = vmatprep.subr.mxu0 0.0
        %981 = vmatpush1.msra.mxu0 0.0
        %982 = vmatprep.subr.mxu0 0.0
        %983 = vmatpush1.msra.mxu0 0.0
        %984 = vmatprep.subr.mxu0 0.0
        %985 = vmatpush1.msra.mxu0 0.0
        %986 = vmatprep.subr.mxu0 0.0
        %987 = vmatpush1.msra.mxu0 0.0
        %988 = vmatprep.subr.mxu0 0.0
        %989 = vmatpush1.msra.mxu0 0.0
        %990 = vmatprep.subr.mxu0 0.0
        %991 = vmatpush1.msra.mxu0 %v844
        %992 = vmatprep.subr.mxu0 0.0
        %993 = vmatpush1.msra.mxu0 %v839
        %994 = vmatprep.subr.mxu0 0.0
        %995 = vmatpush2.msra.mxu0 0.0
        %996 = vmatprep.subr.mxu0 0.0
        %997 = vmatpush2.msra.mxu0 0.0
        %998 = vmatprep.subr.mxu0 0.0
        %999 = vmatpush2.msra.mxu0 0.0
        %1000 = vmatprep.subr.mxu0 0.0
        %1001 = vmatpush2.msra.mxu0 0.0
        %1002 = vmatprep.subr.mxu0 0.0
        %1003 = vmatpush2.msra.mxu0 0.0
        %1004 = vmatprep.subr.mxu0 0.0
        %1005 = vmatpush2.msra.mxu0 0.0
        %1006 = vmatprep.subr.mxu0 0.0
        %1007 = vmatpush2.msra.mxu0 0.0
        %1008 = vmatprep.subr.mxu0 0.0
        %1009 = vmatpush2.msra.mxu0 0.0
        %1010 = vmatprep.subr.mxu0 0.0
        %1011 = vmatpush2.msra.mxu0 0.0
        %1012 = vmatprep.subr.mxu0 0.0
        %1013 = vmatpush2.msra.mxu0 0.0
        %1014 = vmatprep.subr.mxu0 0.0
        %1015 = vmatpush2.msra.mxu0 0.0
        %1016 = vmatprep.subr.mxu0 0.0
        %1017 = vmatpush2.msra.mxu0 0.0
        %1018 = vmatprep.subr.mxu0 0.0
        %1019 = vmatpush2.msra.mxu0 0.0
        %1020 = vmatprep.subr.mxu0 0.0
        %1021 = vmatpush2.msra.mxu0 0.0
        %1022 = vmatprep.subr.mxu0 0.0
        %1023 = vmatpush2.msra.mxu0 0.0
        %1024 = vmatprep.subr.mxu0 0.0
        %1025 = vmatpush2.msra.mxu0 0.0
        %1026 = vmatprep.mubr.f32.mxu0 0.0
        %1027 = vmatmul.mubr.f32.gmra.mxu0 %v957
        %v1028 = vpop.f32.mrf.mxu0
        %v1029 = vadd.f32 0.0, %v1028
        %v1030 = vpop.f32.mrf.mxu0
        %1031 = vmatprep.mubr.f32.mxu0 0.0
        %1032 = vmatmul.mubr.f32.gmra.mxu0 %v960
        %v1033 = vpop.f32.mrf.mxu0
        %v1034 = vadd.f32 0.0, %v1033
        %v1035 = vpop.f32.mrf.mxu0
        %1036 = vdwg.mxu0
        %v1037 = vrcp.pop %v952
        %v1038 = vrcp.pop %v955
        %v1039 = vmul.f32 %v952, %v1037
        %v1040 = vmul.f32 %v955, %v1038
        %v1041 = vsub.f32 2.0, %v1039
        %v1042 = vsub.f32 2.0, %v1040
        %v1043 = vmul.f32 %v1037, %v1041
        %v1044 = vmul.f32 %v1038, %v1042
        %v1045 = vmul.f32 %v1029, %v1043
        %v1046 = vmul.f32 %v1034, %v1044
        %v1047 = vld [vmem:[#allocation2] sm:$0xff]
        %v1048 = vld [vmem:[#allocation2 + $0x8] sm:$0xff]
        %v1049 = vld [vmem:[%s562] sm:$0xff]
        %v1051 = vsel %vm847, %v1045, 0
        %v1054 = vsel %vm847, %v1046, 0
        %1056 = vmatprep.subr.mxu0 0.0
        %1057 = vmatpush1.msra.mxu0 0.0
        %1058 = vmatprep.subr.mxu0 0.0
        %1059 = vmatpush1.msra.mxu0 0.0
        %1060 = vmatprep.subr.mxu0 0.0
        %1061 = vmatpush1.msra.mxu0 0.0
        %1062 = vmatprep.subr.mxu0 0.0
        %1063 = vmatpush1.msra.mxu0 0.0
        %1064 = vmatprep.subr.mxu0 0.0
        %1065 = vmatpush1.msra.mxu0 0.0
        %1066 = vmatprep.subr.mxu0 0.0
        %1067 = vmatpush1.msra.mxu0 0.0
        %1068 = vmatprep.subr.mxu0 0.0
        %1069 = vmatpush1.msra.mxu0 0.0
        %1070 = vmatprep.subr.mxu0 0.0
        %1071 = vmatpush1.msra.mxu0 0.0
        %1072 = vmatprep.subr.mxu0 0.0
        %1073 = vmatpush1.msra.mxu0 0.0
        %1074 = vmatprep.subr.mxu0 0.0
        %1075 = vmatpush1.msra.mxu0 0.0
        %1076 = vmatprep.subr.mxu0 0.0
        %1077 = vmatpush1.msra.mxu0 0.0
        %1078 = vmatprep.subr.mxu0 0.0
        %1079 = vmatpush1.msra.mxu0 0.0
        %1080 = vmatprep.subr.mxu0 0.0
        %1081 = vmatpush1.msra.mxu0 0.0
        %1082 = vmatprep.subr.mxu0 0.0
        %1083 = vmatpush1.msra.mxu0 0.0
        %1084 = vmatprep.subr.mxu0 0.0
        %1085 = vmatpush1.msra.mxu0 0.0
        %1086 = vmatprep.subr.mxu0 0.0
        %1087 = vmatpush1.msra.mxu0 %v1049
        %1088 = vmatprep.subr.mxu0 0.0
        %1089 = vmatpush2.msra.mxu0 0.0
        %1090 = vmatprep.subr.mxu0 0.0
        %1091 = vmatpush2.msra.mxu0 0.0
        %1092 = vmatprep.subr.mxu0 0.0
        %1093 = vmatpush2.msra.mxu0 0.0
        %1094 = vmatprep.subr.mxu0 0.0
        %1095 = vmatpush2.msra.mxu0 0.0
        %1096 = vmatprep.subr.mxu0 0.0
        %1097 = vmatpush2.msra.mxu0 0.0
        %1098 = vmatprep.subr.mxu0 0.0
        %1099 = vmatpush2.msra.mxu0 0.0
        %1100 = vmatprep.subr.mxu0 0.0
        %1101 = vmatpush2.msra.mxu0 0.0
        %1102 = vmatprep.subr.mxu0 0.0
        %1103 = vmatpush2.msra.mxu0 0.0
        %1104 = vmatprep.subr.mxu0 0.0
        %1105 = vmatpush2.msra.mxu0 0.0
        %1106 = vmatprep.subr.mxu0 0.0
        %1107 = vmatpush2.msra.mxu0 0.0
        %1108 = vmatprep.subr.mxu0 0.0
        %1109 = vmatpush2.msra.mxu0 0.0
        %1110 = vmatprep.subr.mxu0 0.0
        %1111 = vmatpush2.msra.mxu0 0.0
        %1112 = vmatprep.subr.mxu0 0.0
        %1113 = vmatpush2.msra.mxu0 0.0
        %1114 = vmatprep.subr.mxu0 0.0
        %1115 = vmatpush2.msra.mxu0 0.0
        %1116 = vmatprep.subr.mxu0 0.0
        %1117 = vmatpush2.msra.mxu0 0.0
        %1118 = vmatprep.subr.mxu0 0.0
        %1119 = vmatpush2.msra.mxu0 0.0
        %1120 = vmatprep.mubr.f32.mxu0 0.0
        %1121 = vmatmul.mubr.f32.gmra.mxu0 %v1051
        %v1122 = vpop.f32.mrf.mxu0
        %v1123 = vadd.f32 0.0, %v1122
        %v1124 = vpop.f32.mrf.mxu0
        %1125 = vmatprep.mubr.f32.mxu0 0.0
        %1126 = vmatmul.mubr.f32.gmra.mxu0 %v1054
        %v1127 = vpop.f32.mrf.mxu0
        %v1128 = vadd.f32 0.0, %v1127
        %v1129 = vpop.f32.mrf.mxu0
        %1130 = vdwg.mxu0
        %v1131 = vadd.f32 %v1047, %v1123
        %v1132 = vadd.f32 %v1048, %v1128
        %1133 = vst.msk [vmem:[#allocation2] sm:$0xff] %vm587, %v1131
        %1134 = vst.msk [vmem:[#allocation2 + $0x8] sm:$0xff] %vm587, %v1132
        %p1135 = scmp.eq.s32.totalorder %s31, 3
        // Predicated region
        $region73: #{tpu_custom_call.1} parent=67 // pred_check
          %p1136 = pneg %p1135
        $region74: #{tpu_custom_call.1} parent=67 // pred_check_branch
          %1138 = sbr.rel (%p1136) target = $region76
        $region75: #{tpu_custom_call.1} parent=67 // pred_region
          %v1139 = vld [vmem:[#allocation2] sm:$0xff]
          %v1140 = vld [vmem:[#allocation2 + $0x8] sm:$0xff]
          %v1141 = vld [vmem:[%s9] sm:$0x1]
          %v1143 = vlaneseq
          %v1144 = vshrl.u32 %v1143, 7
          %v1145 = vsub.s32 0, %v1144
          %v1146 = vrot.slane %v1141, %v1145
          %v1148 = vadd.f32 %v1139, %v1146
          %v1149 = vadd.f32 %v1140, %v1146
          %v1150 = vadd.f32 %v570, %v1148
          %v1151 = vadd.f32 %v571, %v1149
          %v1152 = vsel %vm587, %v1150, 0.0
          %1153 = vadd.xlane.f32.xlu0 %v1152
          %v1154 = vpop.xlane.xlu0 %1153
          %v1155 = vsel %vm587, %v1151, 0.0
          %1156 = vadd.xlane.f32.xlu0 %v1155
          %v1157 = vpop.xlane.xlu0 %1156
          %v1158 = vrcp.pop 32.0
          %v1159 = vmul.f32 %v1154, %v1158
          %v1160 = vmul.f32 %v1157, %v1158
          %v1161 = vsub.f32 %v1150, %v1159
          %v1162 = vsub.f32 %v1151, %v1160
          %v1163 = vmul.f32 %v1161, %v1161
          %v1164 = vmul.f32 %v1162, %v1162
          %v1165 = vsel %vm587, %v1163, 0.0
          %1166 = vadd.xlane.f32.xlu0 %v1165
          %v1167 = vpop.xlane.xlu0 %1166
          %v1168 = vsel %vm587, %v1164, 0.0
          %1169 = vadd.xlane.f32.xlu0 %v1168
          %v1170 = vpop.xlane.xlu0 %1169
          %v1171 = vmul.f32 %v1167, %v1158
          %v1172 = vmul.f32 %v1170, %v1158
          %v1173 = vadd.f32 %v1171, 1e-05
          %v1174 = vadd.f32 %v1172, 1e-05
          %v1175 = vrsqrt.pop %v1173
          %v1176 = vrsqrt.pop %v1174
          %v1177 = vmul.f32 %v1161, %v1175
          %v1178 = vmul.f32 %v1162, %v1176
          %v1179 = vld [vmem:[%s10] sm:$0x1]
          %v1181 = vlaneseq
          %v1182 = vshrl.u32 %v1181, 7
          %v1183 = vsub.s32 0, %v1182
          %v1184 = vrot.slane %v1179, %v1183
          %v1186 = vmul.f32 %v1177, %v1184
          %v1187 = vmul.f32 %v1178, %v1184
          %v1188 = vld [vmem:[%s11] sm:$0x1]
          %v1190 = vlaneseq
          %v1191 = vshrl.u32 %v1190, 7
          %v1192 = vsub.s32 0, %v1191
          %v1193 = vrot.slane %v1188, %v1192
          %v1195 = vadd.f32 %v1186, %v1193
          %v1196 = vadd.f32 %v1187, %v1193
          %1197 = vst.msk [vmem:[%s524] sm:$0xff] %vm587, %v1195
          %1198 = vst.msk [vmem:[%s524 + $0x8] sm:$0xff] %vm587, %v1196
        $region76: #{tpu_custom_call.1} parent=67 // pred_fallthru
          _
        %s1199 = sand.u32 %s343, 1
        %s1200 = scalar_lea.sflag [#allocation4], %s1199
        %s1201 = sand.u32 %s343, 1
        %s1202 = smul.addr %s1201, 16
        %s1203 = scalar_lea.vmem [#allocation3], %s1202
        // Predicated region
        $region77: #{tpu_custom_call.1} parent=67 // pred_check
          %p1204 = pneg %p353
        $region78: #{tpu_custom_call.1} parent=67 // pred_check_branch
          %1206 = sbr.rel (%p1204) target = $region80
        $region79: #{tpu_custom_call.1} parent=67 // pred_region
          %s1208 = ssub.s32 256, 256
          %1209 = vsyncadd %s1200, %s1208
          %s1210 = smul.addr %s30, 2
          %s1211 = smul.addr %s1210, 128
          %s1212 = scalar_lea.hbm %s12, %s1211
          %s1213 = sshll.u32 %s1203, 4
          %s1214 = int_to_ptr.vmem [resolvable:$true] %s1213
          %1219 = dma.vmem_to_hbm [thread:$0]  %s1214, 256, %s1212, %s1200, 128, 128, 8
        $region80: #{tpu_custom_call.1} parent=67 // pred_fallthru
          _
      $region68: #{tpu_custom_call.1} parent=5 // pred_fallthru
        _
      %p1220 = scmp.le.s32.totalorder 2, %s21
      // Predicated region
      $region81: #{tpu_custom_call.1} parent=5 // pred_check
        %p1221 = pneg %p1220
      $region82: #{tpu_custom_call.1} parent=5 // pred_check_branch
        %1223 = sbr.rel (%p1221) target = $region84
      $region83: #{tpu_custom_call.1} parent=5 // pred_region
        %s1224 = ssub.s32 %s21, 2
        // Predicated region
        $region85: #{tpu_custom_call.1} parent=83 // pred_check
          %p1225 = pneg %p359
        $region86: #{tpu_custom_call.1} parent=83 // pred_check_branch
          %1227 = sbr.rel (%p1225) target = $region88
        $region87: #{tpu_custom_call.1} parent=83 // pred_region
          %s1228 = sand.u32 %s344, 1
          %s1229 = scalar_lea.sflag [#allocation4], %s1228
          %s1230 = sand.u32 %s344, 1
          %s1231 = smul.addr %s1230, 16
          %s1232 = scalar_lea.vmem [#allocation3], %s1231
          %1233 = dma.done %s1229, 256
        $region88: #{tpu_custom_call.1} parent=83 // pred_fallthru
          _
      $region84: #{tpu_custom_call.1} parent=5 // pred_fallthru
        _
    $region6: #{tpu_custom_call.1} parent=1 // loop_footer
      %s25 = sadd.s32 1, %s21
    $region7: #{tpu_custom_call.1} parent=1 // loop_footer_branch
      %20 = sbr.rel target = $region3
    $region8: #{tpu_custom_call.1} parent=1 // loop_exit
      _
    %1234 = vsyncpa [#allocation4], 1
    %s1235 = scalar_lea.sflag [#allocation4], 1
    %1236 = vsyncpa %s1235, 1

</llo_original>
